<compile_context>
chip_gen: v6e
topology: v6e:2x2x1
jax: 0.10.0
libtpu: 0.0.40
codegen_flags: <defaults>
</compile_context>

<pallas_src>
import functools

import jax
import jax.numpy as jnp
from jax.experimental import pallas as pl
from jax.experimental.pallas import tpu as pltpu

NUM_RELATIONS = 3   # len(hgraph.edge_types) in the reference script
NUM_BASES = 2       # args.n_bases
LANE = 128          # pad feature dims to this for lane-dense MXU operands / stores


def _round_up(x, m):
    return ((x + m - 1) // m) * m


def _rgcn_fused_kernel(*refs, num_relations, num_layers, n_nodes):
    """Fused multi-layer RGCN forward. Single invocation; all operands resident in VMEM.

    refs = (adj_aug, x, [w_stacked, bias] * num_layers, out, xw_scratch)
      adj_aug[dst, r*N + src] = A[r, dst, src] for r < R, identity block for r == R (bf16)
      w_stacked[r]            = W_r for r < R, root for r == R   (C_pad, C_pad) bf16
      xw_scratch              = ((R+1)*N, C_pad) bf16 VMEM slab reused across layers
    """
    n_in = 2 + 2 * num_layers
    adj_ref, x_ref = refs[0], refs[1]
    layer_refs = refs[2:n_in]
    out_ref = refs[n_in]
    xw_ref = refs[n_in + 1]

    a = adj_ref[...]                        # (N, (R+1)*N) bf16
    h = x_ref[...]                          # (N, C_pad)   bf16
    n = n_nodes

    out = None
    for i in range(num_layers):
        w_ref, b_ref = layer_refs[2 * i], layer_refs[2 * i + 1]
        # Per-relation transforms (root path included as relation R) written directly
        # into the VMEM scratch slab with STATIC slices — no concatenate materialization.
        for r in range(num_relations + 1):
            xw_ref[pl.ds(r * n, n), :] = jnp.dot(
                h, w_ref[r], preferred_element_type=jnp.float32
            ).astype(jnp.bfloat16)
        # ONE large-K contraction (K = (R+1)*N) replaces R A@x matmuls + the root matmul:
        # a single MXU result-FIFO drain, better systolic occupancy.
        out = jnp.dot(a, xw_ref[...], preferred_element_type=jnp.float32) + b_ref[...]
        if i < num_layers - 1:
            h = jnp.maximum(out, 0.0).astype(jnp.bfloat16)   # fused ReLU between layers
            # TODO(synk): F.dropout(p=0.4, training=self.training) omitted — inference
            # semantics (identity); a stochastic mask would need pltpu.prng_* in-kernel.
    out_ref[...] = out.astype(out_ref.dtype)   # lane-dense (N, C_pad) unmasked store


def rgcn_forward(prepared, x, adj_aug, perturb=None):
    """Full RGCN.forward (all layers) in one pallas_call; returns (N, out_c) f32."""
    if perturb is not None:
        x = x + perturb
    n, c_in = x.shape
    c_pad = prepared[0]["w"].shape[1]           # common padded feature width
    c_out = prepared[-1]["out_c"]
    num_rel_p1 = adj_aug.shape[1] // n
    num_rel = num_rel_p1 - 1
    # Layout contract check (correctness review): adj_aug must be [A_flat | I_N].
    assert adj_aug.shape == (n, num_rel_p1 * n), "adj_aug layout mismatch"
    assert all(p["w"].shape == (num_rel_p1, c_pad, c_pad) for p in prepared)

    # Zero-pad input channels to the common lane-dense width (padding propagates as
    # exact zeros through every layer because padded W rows/cols and bias are zero).
    x_pad = jnp.zeros((n, c_pad), jnp.bfloat16).at[:, :c_in].set(x.astype(jnp.bfloat16))

    flat_params = []
    for p in prepared:
        flat_params += [p["w"], p["bias"]]

    kernel = functools.partial(
        _rgcn_fused_kernel,
        num_relations=num_rel,
        num_layers=len(prepared),
        n_nodes=n,
    )
    # No grid / no BlockSpecs: whole arrays land in VMEM (tiny), single invocation.
    out_pad = pl.pallas_call(
        kernel,
        out_shape=jax.ShapeDtypeStruct((n, c_pad), jnp.float32),
        scratch_shapes=[pltpu.VMEM((num_rel_p1 * n, c_pad), jnp.bfloat16)],
    )(adj_aug, x_pad, *flat_params)
    return out_pad[:, :c_out]


def prepare_params(params, in_c):
    """Hoisted out of the forward path: basis recombination, root stacking, zero-padding
    of all feature dims to a common multiple of 128, bias reshape, MXU dtype casts."""
    dims = [in_c] + [p["root"].shape[1] for p in params]
    c_pad = _round_up(max(dims), LANE)
    prepared = []
    for p in params:
        w = jnp.einsum("rb,bio->rio", p["comp"], p["basis"])        # (R, ci, co) f32
        w_stack = jnp.concatenate([w, p["root"][None]], axis=0)     # (R+1, ci, co)
        r1, ci, co = w_stack.shape
        w_pad = jnp.zeros((r1, c_pad, c_pad), jnp.float32).at[:, :ci, :co].set(w_stack)
        b_pad = jnp.zeros((1, c_pad), jnp.float32).at[0, :co].set(p["bias"])
        prepared.append(dict(
            w=w_pad.astype(jnp.bfloat16),   # (R+1, C_pad, C_pad) bf16, root stacked last
            bias=b_pad,                     # (1, C_pad) f32
            out_c=co,
        ))
    return prepared


def build_relation_adjacency(edge_index, edge_type, num_nodes, num_relations):
    """Dense normalized (message-level mean) adjacency per relation, accumulated in f32.

    Duplicate (dst, src) edges accumulate in both the count and the degree, matching
    PyG's message-level mean over all (possibly duplicate) edges.
    """
    src, dst = edge_index[0], edge_index[1]
    adj = jnp.zeros((num_relations, num_nodes, num_nodes), jnp.float32)
    adj = adj.at[edge_type, dst, src].add(1.0)
    deg = adj.sum(axis=-1, keepdims=True)
    adj = jnp.where(deg > 0, adj / jnp.where(deg > 0, deg, 1.0), 0.0)
    return adj


def flatten_adjacency(adj):
    """(R, N, N) -> (N, (R+1)*N): A_aug = [A_flat | I_N], bf16 only at the MXU boundary.

    A_aug[dst, r*N + src] = A[r, dst, src] for r < R; the trailing identity block carries
    the root/self path so each layer is a single K=(R+1)*N contraction (small-N only).
    """
    r, n, _ = adj.shape
    a_flat = jnp.transpose(adj, (1, 0, 2)).reshape(n, r * n)
    a_aug = jnp.concatenate([a_flat, jnp.eye(n, dtype=jnp.float32)], axis=1)
    return a_aug.astype(jnp.bfloat16)


def init_params(key, in_c, hid_c, out_c, num_relations, num_bases, n_layers=2):
    dims = [in_c] + [hid_c] * (n_layers - 1) + [out_c]
    params = []
    for i in range(n_layers):
        ci, co = dims[i], dims[i + 1]
        key, k1, k2, k3 = jax.random.split(key, 4)
        params.append(
            dict(
                basis=jax.random.normal(k1, (num_bases, ci, co), jnp.float32) * 0.1,
                comp=jax.random.normal(k2, (num_relations, num_bases), jnp.float32) * 0.5,
                root=jax.random.normal(k3, (ci, co), jnp.float32) * 0.1,
                bias=jnp.zeros((co,), jnp.float32),
            )
        )
    return params


def _rgcn_conv_ref(x, adj, comp, basis, root, bias, apply_relu):
    """Pure-JAX f32 reference for one RGCNConv layer (module semantics)."""
    w = jnp.einsum("rb,bio->rio", comp, basis)
    agg = jnp.einsum("rij,jc->ric", adj, x)
    out = jnp.einsum("ric,rco->io", agg, w) + x @ root + bias
    return jnp.maximum(out, 0.0) if apply_relu else out


if __name__ == "__main__":
    key = jax.random.PRNGKey(0)
    num_nodes, num_edges = 64, 256
    in_c, hid_c, out_c = 16, 32, 8

    key, kx, ke, kt = jax.random.split(key, 4)
    x = jax.random.normal(kx, (num_nodes, in_c), jnp.float32)
    edge_index = jax.random.randint(ke, (2, num_edges), 0, num_nodes)
    edge_type = jax.random.randint(kt, (num_edges,), 0, NUM_RELATIONS)

    params = init_params(key, in_c, hid_c, out_c, NUM_RELATIONS, NUM_BASES, n_layers=2)
    adj = build_relation_adjacency(edge_index, edge_type, num_nodes, NUM_RELATIONS)
    adj_aug = flatten_adjacency(adj)          # (N, (R+1)*N) bf16, built once per graph
    prepared = prepare_params(params, in_c)   # recombination/padding hoisted out of fwd

    out = rgcn_forward(prepared, x, adj_aug)
    out = jax.block_until_ready(out)

    # Pure-JAX f32 reference. The kernel feeds the MXU bf16 operands with f32
    # accumulation, so the tolerance is relaxed accordingly (a structural bug would
    # produce O(1) errors, far above this bound).
    ref = x
    for i, p in enumerate(params):
        ref = _rgcn_conv_ref(
            ref, adj, p["comp"], p["basis"], p["root"], p["bias"],
            apply_relu=(i < len(params) - 1),
        )
    assert out.shape == (num_nodes, out_c)
    max_err = float(jnp.max(jnp.abs(out - ref)))
    assert jnp.allclose(out, ref, atol=5e-2, rtol=5e-2), (
        f"Pallas RGCN mismatch vs reference (max abs err {max_err})"
    )

    print("KERNEL_OK")
</pallas_src>

<mosaic_0001>
module attributes {stable_mosaic.version = 11 : i64} {
  func.func @_rgcn_fused_kernel(%arg0: memref<64x256xbf16, #tpu.memory_space<vmem>>, %arg1: memref<64x128xbf16, #tpu.memory_space<vmem>>, %arg2: memref<4x128x128xbf16, #tpu.memory_space<vmem>>, %arg3: memref<1x128xf32, #tpu.memory_space<vmem>>, %arg4: memref<4x128x128xbf16, #tpu.memory_space<vmem>>, %arg5: memref<1x128xf32, #tpu.memory_space<vmem>>, %arg6: memref<64x128xf32, #tpu.memory_space<vmem>>, %arg7: memref<256x128xbf16, #tpu.memory_space<vmem>>) attributes {dimension_semantics = [], scalar_prefetch = 0 : i64, scratch_operands = 1 : i64, tpu.core_type = #tpu.core_type<tc>} {
    %c0 = arith.constant 0 : index
    %c0_0 = arith.constant 0 : index
    %0 = vector.load %arg0[%c0, %c0_0] : memref<64x256xbf16, #tpu.memory_space<vmem>>, vector<64x256xbf16>
    %c0_1 = arith.constant 0 : index
    %c0_2 = arith.constant 0 : index
    %1 = vector.load %arg1[%c0_1, %c0_2] : memref<64x128xbf16, #tpu.memory_space<vmem>>, vector<64x128xbf16>
    %c0_3 = arith.constant 0 : index
    %c0_4 = arith.constant 0 : index
    %c0_5 = arith.constant 0 : index
    %2 = vector.load %arg2[%c0_3, %c0_4, %c0_5] : memref<4x128x128xbf16, #tpu.memory_space<vmem>>, vector<1x128x128xbf16>
    %3 = vector.shape_cast %2 : vector<1x128x128xbf16> to vector<128x128xbf16>
    %cst = arith.constant dense<0.000000e+00> : vector<64x128xf32>
    %4 = tpu.matmul %1, %3, %cst {dimension_numbers = #tpu.dot_dimension_numbers<[1], [0], [0], [1], [0, 0, 1, 1], [], []>} : vector<64x128xbf16>, vector<128x128xbf16>, vector<64x128xf32> -> vector<64x128xf32>
    %5 = arith.truncf %4 : vector<64x128xf32> to vector<64x128xbf16>
    %c0_6 = arith.constant 0 : index
    %c0_7 = arith.constant 0 : index
    %6 = vector.load %arg7[%c0_6, %c0_7] : memref<256x128xbf16, #tpu.memory_space<vmem>>, vector<64x128xbf16>
    tpu.vector_store %arg7[%c0_6, %c0_7], %5 {strides = array<i32>} : memref<256x128xbf16, #tpu.memory_space<vmem>>, vector<64x128xbf16>,
    %c1 = arith.constant 1 : index
    %c0_8 = arith.constant 0 : index
    %c0_9 = arith.constant 0 : index
    %7 = vector.load %arg2[%c1, %c0_8, %c0_9] : memref<4x128x128xbf16, #tpu.memory_space<vmem>>, vector<1x128x128xbf16>
    %8 = vector.shape_cast %7 : vector<1x128x128xbf16> to vector<128x128xbf16>
    %cst_10 = arith.constant dense<0.000000e+00> : vector<64x128xf32>
    %9 = tpu.matmul %1, %8, %cst_10 {dimension_numbers = #tpu.dot_dimension_numbers<[1], [0], [0], [1], [0, 0, 1, 1], [], []>} : vector<64x128xbf16>, vector<128x128xbf16>, vector<64x128xf32> -> vector<64x128xf32>
    %10 = arith.truncf %9 : vector<64x128xf32> to vector<64x128xbf16>
    %c64 = arith.constant 64 : index
    %c0_11 = arith.constant 0 : index
    %11 = vector.load %arg7[%c64, %c0_11] : memref<256x128xbf16, #tpu.memory_space<vmem>>, vector<64x128xbf16>
    tpu.vector_store %arg7[%c64, %c0_11], %10 {strides = array<i32>} : memref<256x128xbf16, #tpu.memory_space<vmem>>, vector<64x128xbf16>,
    %c2 = arith.constant 2 : index
    %c0_12 = arith.constant 0 : index
    %c0_13 = arith.constant 0 : index
    %12 = vector.load %arg2[%c2, %c0_12, %c0_13] : memref<4x128x128xbf16, #tpu.memory_space<vmem>>, vector<1x128x128xbf16>
    %13 = vector.shape_cast %12 : vector<1x128x128xbf16> to vector<128x128xbf16>
    %cst_14 = arith.constant dense<0.000000e+00> : vector<64x128xf32>
    %14 = tpu.matmul %1, %13, %cst_14 {dimension_numbers = #tpu.dot_dimension_numbers<[1], [0], [0], [1], [0, 0, 1, 1], [], []>} : vector<64x128xbf16>, vector<128x128xbf16>, vector<64x128xf32> -> vector<64x128xf32>
    %15 = arith.truncf %14 : vector<64x128xf32> to vector<64x128xbf16>
    %c128 = arith.constant 128 : index
    %c0_15 = arith.constant 0 : index
    %16 = vector.load %arg7[%c128, %c0_15] : memref<256x128xbf16, #tpu.memory_space<vmem>>, vector<64x128xbf16>
    tpu.vector_store %arg7[%c128, %c0_15], %15 {strides = array<i32>} : memref<256x128xbf16, #tpu.memory_space<vmem>>, vector<64x128xbf16>,
    %c3 = arith.constant 3 : index
    %c0_16 = arith.constant 0 : index
    %c0_17 = arith.constant 0 : index
    %17 = vector.load %arg2[%c3, %c0_16, %c0_17] : memref<4x128x128xbf16, #tpu.memory_space<vmem>>, vector<1x128x128xbf16>
    %18 = vector.shape_cast %17 : vector<1x128x128xbf16> to vector<128x128xbf16>
    %cst_18 = arith.constant dense<0.000000e+00> : vector<64x128xf32>
    %19 = tpu.matmul %1, %18, %cst_18 {dimension_numbers = #tpu.dot_dimension_numbers<[1], [0], [0], [1], [0, 0, 1, 1], [], []>} : vector<64x128xbf16>, vector<128x128xbf16>, vector<64x128xf32> -> vector<64x128xf32>
    %20 = arith.truncf %19 : vector<64x128xf32> to vector<64x128xbf16>
    %c192 = arith.constant 192 : index
    %c0_19 = arith.constant 0 : index
    %21 = vector.load %arg7[%c192, %c0_19] : memref<256x128xbf16, #tpu.memory_space<vmem>>, vector<64x128xbf16>
    tpu.vector_store %arg7[%c192, %c0_19], %20 {strides = array<i32>} : memref<256x128xbf16, #tpu.memory_space<vmem>>, vector<64x128xbf16>,
    %c0_20 = arith.constant 0 : index
    %c0_21 = arith.constant 0 : index
    %22 = vector.load %arg7[%c0_20, %c0_21] : memref<256x128xbf16, #tpu.memory_space<vmem>>, vector<256x128xbf16>
    %cst_22 = arith.constant dense<0.000000e+00> : vector<64x128xf32>
    %23 = tpu.matmul %0, %22, %cst_22 {dimension_numbers = #tpu.dot_dimension_numbers<[1], [0], [0], [1], [0, 0, 1, 1], [], []>} : vector<64x256xbf16>, vector<256x128xbf16>, vector<64x128xf32> -> vector<64x128xf32>
    %c0_23 = arith.constant 0 : index
    %c0_24 = arith.constant 0 : index
    %24 = vector.load %arg3[%c0_23, %c0_24] : memref<1x128xf32, #tpu.memory_space<vmem>>, vector<1x128xf32>
    %25 = vector.broadcast %24 : vector<1x128xf32> to vector<64x128xf32>
    %26 = arith.addf %23, %25 : vector<64x128xf32>
    %cst_25 = arith.constant 0.000000e+00 : f32
    %27 = vector.broadcast %cst_25 : f32 to vector<64x128xf32>
    %28 = arith.maximumf %26, %27 : vector<64x128xf32>
    %29 = arith.truncf %28 : vector<64x128xf32> to vector<64x128xbf16>
    %c0_26 = arith.constant 0 : index
    %c0_27 = arith.constant 0 : index
    %c0_28 = arith.constant 0 : index
    %30 = vector.load %arg4[%c0_26, %c0_27, %c0_28] : memref<4x128x128xbf16, #tpu.memory_space<vmem>>, vector<1x128x128xbf16>
    %31 = vector.shape_cast %30 : vector<1x128x128xbf16> to vector<128x128xbf16>
    %cst_29 = arith.constant dense<0.000000e+00> : vector<64x128xf32>
    %32 = tpu.matmul %29, %31, %cst_29 {dimension_numbers = #tpu.dot_dimension_numbers<[1], [0], [0], [1], [0, 0, 1, 1], [], []>} : vector<64x128xbf16>, vector<128x128xbf16>, vector<64x128xf32> -> vector<64x128xf32>
    %33 = arith.truncf %32 : vector<64x128xf32> to vector<64x128xbf16>
    %c0_30 = arith.constant 0 : index
    %c0_31 = arith.constant 0 : index
    %34 = vector.load %arg7[%c0_30, %c0_31] : memref<256x128xbf16, #tpu.memory_space<vmem>>, vector<64x128xbf16>
    tpu.vector_store %arg7[%c0_30, %c0_31], %33 {strides = array<i32>} : memref<256x128xbf16, #tpu.memory_space<vmem>>, vector<64x128xbf16>,
    %c1_32 = arith.constant 1 : index
    %c0_33 = arith.constant 0 : index
    %c0_34 = arith.constant 0 : index
    %35 = vector.load %arg4[%c1_32, %c0_33, %c0_34] : memref<4x128x128xbf16, #tpu.memory_space<vmem>>, vector<1x128x128xbf16>
    %36 = vector.shape_cast %35 : vector<1x128x128xbf16> to vector<128x128xbf16>
    %cst_35 = arith.constant dense<0.000000e+00> : vector<64x128xf32>
    %37 = tpu.matmul %29, %36, %cst_35 {dimension_numbers = #tpu.dot_dimension_numbers<[1], [0], [0], [1], [0, 0, 1, 1], [], []>} : vector<64x128xbf16>, vector<128x128xbf16>, vector<64x128xf32> -> vector<64x128xf32>
    %38 = arith.truncf %37 : vector<64x128xf32> to vector<64x128xbf16>
    %c64_36 = arith.constant 64 : index
    %c0_37 = arith.constant 0 : index
    %39 = vector.load %arg7[%c64_36, %c0_37] : memref<256x128xbf16, #tpu.memory_space<vmem>>, vector<64x128xbf16>
    tpu.vector_store %arg7[%c64_36, %c0_37], %38 {strides = array<i32>} : memref<256x128xbf16, #tpu.memory_space<vmem>>, vector<64x128xbf16>,
    %c2_38 = arith.constant 2 : index
    %c0_39 = arith.constant 0 : index
    %c0_40 = arith.constant 0 : index
    %40 = vector.load %arg4[%c2_38, %c0_39, %c0_40] : memref<4x128x128xbf16, #tpu.memory_space<vmem>>, vector<1x128x128xbf16>
    %41 = vector.shape_cast %40 : vector<1x128x128xbf16> to vector<128x128xbf16>
    %cst_41 = arith.constant dense<0.000000e+00> : vector<64x128xf32>
    %42 = tpu.matmul %29, %41, %cst_41 {dimension_numbers = #tpu.dot_dimension_numbers<[1], [0], [0], [1], [0, 0, 1, 1], [], []>} : vector<64x128xbf16>, vector<128x128xbf16>, vector<64x128xf32> -> vector<64x128xf32>
    %43 = arith.truncf %42 : vector<64x128xf32> to vector<64x128xbf16>
    %c128_42 = arith.constant 128 : index
    %c0_43 = arith.constant 0 : index
    %44 = vector.load %arg7[%c128_42, %c0_43] : memref<256x128xbf16, #tpu.memory_space<vmem>>, vector<64x128xbf16>
    tpu.vector_store %arg7[%c128_42, %c0_43], %43 {strides = array<i32>} : memref<256x128xbf16, #tpu.memory_space<vmem>>, vector<64x128xbf16>,
    %c3_44 = arith.constant 3 : index
    %c0_45 = arith.constant 0 : index
    %c0_46 = arith.constant 0 : index
    %45 = vector.load %arg4[%c3_44, %c0_45, %c0_46] : memref<4x128x128xbf16, #tpu.memory_space<vmem>>, vector<1x128x128xbf16>
    %46 = vector.shape_cast %45 : vector<1x128x128xbf16> to vector<128x128xbf16>
    %cst_47 = arith.constant dense<0.000000e+00> : vector<64x128xf32>
    %47 = tpu.matmul %29, %46, %cst_47 {dimension_numbers = #tpu.dot_dimension_numbers<[1], [0], [0], [1], [0, 0, 1, 1], [], []>} : vector<64x128xbf16>, vector<128x128xbf16>, vector<64x128xf32> -> vector<64x128xf32>
    %48 = arith.truncf %47 : vector<64x128xf32> to vector<64x128xbf16>
    %c192_48 = arith.constant 192 : index
    %c0_49 = arith.constant 0 : index
    %49 = vector.load %arg7[%c192_48, %c0_49] : memref<256x128xbf16, #tpu.memory_space<vmem>>, vector<64x128xbf16>
    tpu.vector_store %arg7[%c192_48, %c0_49], %48 {strides = array<i32>} : memref<256x128xbf16, #tpu.memory_space<vmem>>, vector<64x128xbf16>,
    %c0_50 = arith.constant 0 : index
    %c0_51 = arith.constant 0 : index
    %50 = vector.load %arg7[%c0_50, %c0_51] : memref<256x128xbf16, #tpu.memory_space<vmem>>, vector<256x128xbf16>
    %cst_52 = arith.constant dense<0.000000e+00> : vector<64x128xf32>
    %51 = tpu.matmul %0, %50, %cst_52 {dimension_numbers = #tpu.dot_dimension_numbers<[1], [0], [0], [1], [0, 0, 1, 1], [], []>} : vector<64x256xbf16>, vector<256x128xbf16>, vector<64x128xf32> -> vector<64x128xf32>
    %c0_53 = arith.constant 0 : index
    %c0_54 = arith.constant 0 : index
    %52 = vector.load %arg5[%c0_53, %c0_54] : memref<1x128xf32, #tpu.memory_space<vmem>>, vector<1x128xf32>
    %53 = vector.broadcast %52 : vector<1x128xf32> to vector<64x128xf32>
    %54 = arith.addf %51, %53 : vector<64x128xf32>
    %c0_55 = arith.constant 0 : index
    %c0_56 = arith.constant 0 : index
    %55 = vector.load %arg6[%c0_55, %c0_56] : memref<64x128xf32, #tpu.memory_space<vmem>>, vector<64x128xf32>
    tpu.vector_store %arg6[%c0_55, %c0_56], %54 {strides = array<i32>} : memref<64x128xf32, #tpu.memory_space<vmem>>, vector<64x128xf32>,
    return
  }
}

</mosaic_0001>

<llo_original>
// kernel: tpu_custom_call.1
$region0: #{tpu_custom_call.1}
  #allocation0 [shape = 'u32[]', space=smem, size = 0x4, offset = 0x4, fixed_abs, tag = 'smem constant byte address 0x4 - core index']
  #allocation1 [shape = 'u32[144,128]{1,0:T(1,128)}', space=vmem, size = 0x12000, scoped, tag = 'internal scratch']
  #allocation2 [shape = 'bf16[256,128]{1,0:T(8,128)(2,1)}', space=vmem, size = 0x10000, scoped, tag = 'scratch operand']
  %s0 = inlined_call_operand.hbm [shape: bf16[64,256], index: 0, kind: input, shape index: {}]
  %s1 = inlined_call_operand.hbm [shape: bf16[64,128], index: 1, kind: input, shape index: {}]
  %s2 = inlined_call_operand.hbm [shape: bf16[4,128,128], index: 2, kind: input, shape index: {}]
  %s3 = inlined_call_operand.vmem [shape: f32[1,128], index: 3, kind: input, shape index: {}]
  %s4 = inlined_call_operand.hbm [shape: bf16[4,128,128], index: 4, kind: input, shape index: {}]
  %s5 = inlined_call_operand.vmem [shape: f32[1,128], index: 5, kind: input, shape index: {}]
  %s6 = inlined_call_operand.hbm [shape: f32[64,128], index: 6, kind: output, shape index: {}]
  %s7 = sld [smem:[#allocation0]]
  $region50: #{tpu_custom_call.1} parent=0
    _
  %s9 = ssub.s32 1, %s7
  %s10 = scalar_select 0, %s9, %s7
  $region1: #{tpu_custom_call.1} parent=0
    #allocation3 [shape = 'u8[32768]{0}', space=vmem, size = 0x8000, scoped, tag = 'input window, operand 0, single buffered']
    #allocation4 [shape = 's32[1]{0}', space=sflag, size = 0x4, scoped, tag = 'scoped memory for tpu_custom_call.1']
    #allocation5 [shape = 's32[1]{0}', space=sflag, size = 0x4, scoped, tag = 'scoped memory for tpu_custom_call.1']
    #allocation6 [shape = 'u8[16384]{0}', space=vmem, size = 0x4000, scoped, tag = 'input window, operand 1, single buffered']
    #allocation7 [shape = 's32[1]{0}', space=sflag, size = 0x4, scoped, tag = 'scoped memory for tpu_custom_call.1']
    #allocation8 [shape = 'u8[131072]{0}', space=vmem, size = 0x20000, scoped, tag = 'input window, operand 2, single buffered']
    #allocation9 [shape = 'u8[131072]{0}', space=vmem, size = 0x20000, scoped, tag = 'input window, operand 4, single buffered']
    #allocation10 [shape = 's32[1]{0}', space=sflag, size = 0x4, scoped, tag = 'scoped memory for tpu_custom_call.1']
    #allocation11 [shape = 'u8[32768]{0}', space=vmem, size = 0x8000, scoped, tag = 'output window, operand 0, single buffered']
    %11 = vsyncpa [#allocation4], 0
    %12 = vsyncpa [#allocation7], 0
    %13 = vsyncpa [#allocation10], 0
    %14 = vsyncpa [#allocation5], 0
    // Predicated region
    $region2: #{tpu_custom_call.1} parent=1 // pred_check
      _
    $region3: #{tpu_custom_call.1} parent=1 // pred_check_branch
      %16 = sbr.rel (0) target = $region5
    $region4: #{tpu_custom_call.1} parent=1 // pred_region
      %s18 = ssub.s32 1024, 1024
      %19 = vsyncadd [#allocation4], %s18
      %s20 = sshll.u32 [#allocation3], 4
      %s21 = int_to_ptr.vmem [resolvable:$true] %s20
      %26 = dma.hbm_to_vmem [thread:$0]  %s0, 1024, %s21, [#allocation4], 128, 128, 8
    $region5: #{tpu_custom_call.1} parent=1 // pred_fallthru
      _
    // Predicated region
    $region6: #{tpu_custom_call.1} parent=1 // pred_check
      _
    $region7: #{tpu_custom_call.1} parent=1 // pred_check_branch
      %28 = sbr.rel (0) target = $region9
    $region8: #{tpu_custom_call.1} parent=1 // pred_region
      %s30 = ssub.s32 512, 512
      %31 = vsyncadd [#allocation7], %s30
      %s32 = sshll.u32 [#allocation6], 4
      %s33 = int_to_ptr.vmem [resolvable:$true] %s32
      %38 = dma.hbm_to_vmem [thread:$0]  %s1, 512, %s33, [#allocation7], 64, 64, 4
    $region9: #{tpu_custom_call.1} parent=1 // pred_fallthru
      _
    // Predicated region
    $region10: #{tpu_custom_call.1} parent=1 // pred_check
      _
    $region11: #{tpu_custom_call.1} parent=1 // pred_check_branch
      %40 = sbr.rel (0) target = $region13
    $region12: #{tpu_custom_call.1} parent=1 // pred_region
      %s42 = ssub.s32 4096, 4096
      %43 = vsyncadd [#allocation7], %s42
      %s44 = sshll.u32 [#allocation8], 4
      %s45 = int_to_ptr.vmem [resolvable:$true] %s44
      %50 = dma.hbm_to_vmem [thread:$0]  %s2, 4096, %s45, [#allocation7], 64, 64, 4
    $region13: #{tpu_custom_call.1} parent=1 // pred_fallthru
      _
    // Predicated region
    $region14: #{tpu_custom_call.1} parent=1 // pred_check
      _
    $region15: #{tpu_custom_call.1} parent=1 // pred_check_branch
      %52 = sbr.rel (0) target = $region17
    $region16: #{tpu_custom_call.1} parent=1 // pred_region
      _
    $region17: #{tpu_custom_call.1} parent=1 // pred_fallthru
      _
    // Predicated region
    $region18: #{tpu_custom_call.1} parent=1 // pred_check
      _
    $region19: #{tpu_custom_call.1} parent=1 // pred_check_branch
      %54 = sbr.rel (0) target = $region21
    $region20: #{tpu_custom_call.1} parent=1 // pred_region
      %s56 = ssub.s32 4096, 4096
      %57 = vsyncadd [#allocation10], %s56
      %s58 = sshll.u32 [#allocation9], 4
      %s59 = int_to_ptr.vmem [resolvable:$true] %s58
      %64 = dma.hbm_to_vmem [thread:$0]  %s4, 4096, %s59, [#allocation10], 64, 64, 4
    $region21: #{tpu_custom_call.1} parent=1 // pred_fallthru
      _
    // Predicated region
    $region22: #{tpu_custom_call.1} parent=1 // pred_check
      _
    $region23: #{tpu_custom_call.1} parent=1 // pred_check_branch
      %66 = sbr.rel (0) target = $region25
    $region24: #{tpu_custom_call.1} parent=1 // pred_region
      _
    $region25: #{tpu_custom_call.1} parent=1 // pred_fallthru
      _
    // Predicated region
    $region26: #{tpu_custom_call.1} parent=1 // pred_check
      _
    $region27: #{tpu_custom_call.1} parent=1 // pred_check_branch
      %68 = sbr.rel (0) target = $region29
    $region28: #{tpu_custom_call.1} parent=1 // pred_region
      %69 = dma.done [#allocation4], 1024
    $region29: #{tpu_custom_call.1} parent=1 // pred_fallthru
      _
    // Predicated region
    $region30: #{tpu_custom_call.1} parent=1 // pred_check
      _
    $region31: #{tpu_custom_call.1} parent=1 // pred_check_branch
      %71 = sbr.rel (0) target = $region33
    $region32: #{tpu_custom_call.1} parent=1 // pred_region
      %72 = dma.done [#allocation7], 512
    $region33: #{tpu_custom_call.1} parent=1 // pred_fallthru
      _
    // Predicated region
    $region34: #{tpu_custom_call.1} parent=1 // pred_check
      _
    $region35: #{tpu_custom_call.1} parent=1 // pred_check_branch
      %74 = sbr.rel (0) target = $region37
    $region36: #{tpu_custom_call.1} parent=1 // pred_region
      %75 = dma.done [#allocation7], 4096
    $region37: #{tpu_custom_call.1} parent=1 // pred_fallthru
      _
    // Predicated region
    $region38: #{tpu_custom_call.1} parent=1 // pred_check
      _
    $region39: #{tpu_custom_call.1} parent=1 // pred_check_branch
      %77 = sbr.rel (0) target = $region41
    $region40: #{tpu_custom_call.1} parent=1 // pred_region
      %78 = dma.done [#allocation10], 4096
    $region41: #{tpu_custom_call.1} parent=1 // pred_fallthru
      _
    %v80 = vld [vmem:[#allocation3] sm:$0xff]
    %v81 = vld [vmem:[#allocation3 + $0x8] sm:$0xff]
    %v82 = vld [vmem:[#allocation3 + $0x10] sm:$0xff]
    %v83 = vld [vmem:[#allocation3 + $0x18] sm:$0xff]
    %v84 = vld [vmem:[#allocation3 + $0x20] sm:$0xff]
    %v85 = vld [vmem:[#allocation3 + $0x28] sm:$0xff]
    %v86 = vld [vmem:[#allocation3 + $0x30] sm:$0xff]
    %v87 = vld [vmem:[#allocation3 + $0x38] sm:$0xff]
    %v88 = vld [vmem:[#allocation6] sm:$0xf]
    %v89 = vld [vmem:[#allocation6 + $0x4] sm:$0xf]
    %v90 = vld [vmem:[#allocation6 + $0x8] sm:$0xf]
    %v91 = vld [vmem:[#allocation6 + $0xc] sm:$0xf]
    %v92 = vld [vmem:[#allocation6 + $0x10] sm:$0xf]
    %v93 = vld [vmem:[#allocation6 + $0x14] sm:$0xf]
    %v94 = vld [vmem:[#allocation6 + $0x18] sm:$0xf]
    %v95 = vld [vmem:[#allocation6 + $0x1c] sm:$0xf]
    %v96 = vld [vmem:[#allocation8] sm:$0xf]
    %v97 = vld [vmem:[#allocation8 + $0x4] sm:$0xf]
    %v98 = vld [vmem:[#allocation8 + $0x8] sm:$0xf]
    %v99 = vld [vmem:[#allocation8 + $0xc] sm:$0xf]
    %v100 = vld [vmem:[#allocation8 + $0x10] sm:$0xf]
    %v101 = vld [vmem:[#allocation8 + $0x14] sm:$0xf]
    %v102 = vld [vmem:[#allocation8 + $0x18] sm:$0xf]
    %v103 = vld [vmem:[#allocation8 + $0x1c] sm:$0xf]
    %v104 = vld [vmem:[#allocation8 + $0x20] sm:$0xf]
    %v105 = vld [vmem:[#allocation8 + $0x24] sm:$0xf]
    %v106 = vld [vmem:[#allocation8 + $0x28] sm:$0xf]
    %v107 = vld [vmem:[#allocation8 + $0x2c] sm:$0xf]
    %v108 = vld [vmem:[#allocation8 + $0x30] sm:$0xf]
    %v109 = vld [vmem:[#allocation8 + $0x34] sm:$0xf]
    %v110 = vld [vmem:[#allocation8 + $0x38] sm:$0xf]
    %v111 = vld [vmem:[#allocation8 + $0x3c] sm:$0xf]
    %v120 = vunpack.c.l.b16 %v88
    %v121 = vunpack.c.l.b16 %v89
    %v122 = vunpack.c.l.b16 %v90
    %v123 = vunpack.c.l.b16 %v91
    %v124 = vunpack.c.l.b16 %v92
    %v125 = vunpack.c.l.b16 %v93
    %v126 = vunpack.c.l.b16 %v94
    %v127 = vunpack.c.l.b16 %v95
    %v128 = vpack.c.b16 %v121, %v120
    %v129 = vpack.c.b16 %v123, %v122
    %v130 = vpack.c.b16 %v125, %v124
    %v131 = vpack.c.b16 %v127, %v126
    %v152 = vunpack.c.l.b16 %v96
    %v153 = vunpack.c.l.b16 %v97
    %v154 = vunpack.c.l.b16 %v98
    %v155 = vunpack.c.l.b16 %v99
    %v156 = vunpack.c.l.b16 %v100
    %v157 = vunpack.c.l.b16 %v101
    %v158 = vunpack.c.l.b16 %v102
    %v159 = vunpack.c.l.b16 %v103
    %v160 = vunpack.c.l.b16 %v104
    %v161 = vunpack.c.l.b16 %v105
    %v162 = vunpack.c.l.b16 %v106
    %v163 = vunpack.c.l.b16 %v107
    %v164 = vunpack.c.l.b16 %v108
    %v165 = vunpack.c.l.b16 %v109
    %v166 = vunpack.c.l.b16 %v110
    %v167 = vunpack.c.l.b16 %v111
    %v168 = vpack.c.b16 %v153, %v152
    %v169 = vpack.c.b16 %v155, %v154
    %v170 = vpack.c.b16 %v157, %v156
    %v171 = vpack.c.b16 %v159, %v158
    %v172 = vpack.c.b16 %v161, %v160
    %v173 = vpack.c.b16 %v163, %v162
    %v174 = vpack.c.b16 %v165, %v164
    %v175 = vpack.c.b16 %v167, %v166
    %184 = vmatprep.subr.bf16.mxu0 0
    %185 = vmatpush1.bf16.msra.mxu0 %v175
    %186 = vmatprep.subr.bf16.mxu0 0
    %187 = vmatpush1.bf16.msra.mxu0 %v174
    %188 = vmatprep.subr.bf16.mxu0 0
    %189 = vmatpush1.bf16.msra.mxu0 %v173
    %190 = vmatprep.subr.bf16.mxu0 0
    %191 = vmatpush1.bf16.msra.mxu0 %v172
    %192 = vmatprep.subr.bf16.mxu0 0
    %193 = vmatpush1.bf16.msra.mxu0 %v171
    %194 = vmatprep.subr.bf16.mxu0 0
    %195 = vmatpush1.bf16.msra.mxu0 %v170
    %196 = vmatprep.subr.bf16.mxu0 0
    %197 = vmatpush1.bf16.msra.mxu0 %v169
    %198 = vmatprep.subr.bf16.mxu0 0
    %199 = vmatpush1.bf16.msra.mxu0 %v168
    %200 = vmatprep.subr.bf16.mxu0 0
    %201 = vmatpush2.bf16.msra.mxu0 0
    %202 = vmatprep.subr.bf16.mxu0 0
    %203 = vmatpush2.bf16.msra.mxu0 0
    %204 = vmatprep.subr.bf16.mxu0 0
    %205 = vmatpush2.bf16.msra.mxu0 0
    %206 = vmatprep.subr.bf16.mxu0 0
    %207 = vmatpush2.bf16.msra.mxu0 0
    %208 = vmatprep.subr.bf16.mxu0 0
    %209 = vmatpush2.bf16.msra.mxu0 0
    %210 = vmatprep.subr.bf16.mxu0 0
    %211 = vmatpush2.bf16.msra.mxu0 0
    %212 = vmatprep.subr.bf16.mxu0 0
    %213 = vmatpush2.bf16.msra.mxu0 0
    %214 = vmatprep.subr.bf16.mxu0 0
    %215 = vmatpush2.bf16.msra.mxu0 0
    %216 = vmatprep.mubr.bf16.mxu0 0
    %217 = vmatmul.mubr.bf16.gmra.mxu0 %v128
    %v218 = vpop.f32.mrf.mxu0
    %v219 = vadd.f32 0.0, %v218
    %v220 = vpop.f32.mrf.mxu0
    %v221 = vpop.f32.mrf.mxu0
    %v222 = vadd.f32 0.0, %v221
    %v223 = vpop.f32.mrf.mxu0
    %224 = vmatprep.mubr.bf16.mxu0 0
    %225 = vmatmul.mubr.bf16.gmra.mxu0 %v129
    %v226 = vpop.f32.mrf.mxu0
    %v227 = vadd.f32 0.0, %v226
    %v228 = vpop.f32.mrf.mxu0
    %v229 = vpop.f32.mrf.mxu0
    %v230 = vadd.f32 0.0, %v229
    %v231 = vpop.f32.mrf.mxu0
    %232 = vmatprep.mubr.bf16.mxu0 0
    %233 = vmatmul.mubr.bf16.gmra.mxu0 %v130
    %v234 = vpop.f32.mrf.mxu0
    %v235 = vadd.f32 0.0, %v234
    %v236 = vpop.f32.mrf.mxu0
    %v237 = vpop.f32.mrf.mxu0
    %v238 = vadd.f32 0.0, %v237
    %v239 = vpop.f32.mrf.mxu0
    %240 = vmatprep.mubr.bf16.mxu0 0
    %241 = vmatmul.mubr.bf16.gmra.mxu0 %v131
    %v242 = vpop.f32.mrf.mxu0
    %v243 = vadd.f32 0.0, %v242
    %v244 = vpop.f32.mrf.mxu0
    %v245 = vpop.f32.mrf.mxu0
    %v246 = vadd.f32 0.0, %v245
    %v247 = vpop.f32.mrf.mxu0
    %248 = vdwg.mxu0
    %v249 = vpack.c.bf16 %v222, %v219
    %v250 = vpack.c.bf16 %v230, %v227
    %v251 = vpack.c.bf16 %v238, %v235
    %v252 = vpack.c.bf16 %v246, %v243
    %v257 = vunpack.c.l.b16 %v249
    %v258 = vunpack.c.h.b16 %v249
    %v259 = vunpack.c.l.b16 %v250
    %v260 = vunpack.c.h.b16 %v250
    %v261 = vunpack.c.l.b16 %v251
    %v262 = vunpack.c.h.b16 %v251
    %v263 = vunpack.c.l.b16 %v252
    %v264 = vunpack.c.h.b16 %v252
    %v265 = vpack.c.b16 %v257, %v257
    %v266 = vpack.c.b16 %v258, %v258
    %v267 = vpack.c.b16 %v259, %v259
    %v268 = vpack.c.b16 %v260, %v260
    %v269 = vpack.c.b16 %v261, %v261
    %v270 = vpack.c.b16 %v262, %v262
    %v271 = vpack.c.b16 %v263, %v263
    %v272 = vpack.c.b16 %v264, %v264
    %281 = vst [vmem:[#allocation2] sm:$0xf] %v265
    %282 = vst [vmem:[#allocation2 + $0x4] sm:$0xf] %v266
    %283 = vst [vmem:[#allocation2 + $0x8] sm:$0xf] %v267
    %284 = vst [vmem:[#allocation2 + $0xc] sm:$0xf] %v268
    %285 = vst [vmem:[#allocation2 + $0x10] sm:$0xf] %v269
    %286 = vst [vmem:[#allocation2 + $0x14] sm:$0xf] %v270
    %287 = vst [vmem:[#allocation2 + $0x18] sm:$0xf] %v271
    %288 = vst [vmem:[#allocation2 + $0x1c] sm:$0xf] %v272
    %s289 = scalar_lea.vmem [#allocation8], 64
    %v290 = vld [vmem:[%s289] sm:$0xf]
    %v291 = vld [vmem:[%s289 + $0x4] sm:$0xf]
    %v292 = vld [vmem:[%s289 + $0x8] sm:$0xf]
    %v293 = vld [vmem:[%s289 + $0xc] sm:$0xf]
    %v294 = vld [vmem:[%s289 + $0x10] sm:$0xf]
    %v295 = vld [vmem:[%s289 + $0x14] sm:$0xf]
    %v296 = vld [vmem:[%s289 + $0x18] sm:$0xf]
    %v297 = vld [vmem:[%s289 + $0x1c] sm:$0xf]
    %v298 = vld [vmem:[%s289 + $0x20] sm:$0xf]
    %v299 = vld [vmem:[%s289 + $0x24] sm:$0xf]
    %v300 = vld [vmem:[%s289 + $0x28] sm:$0xf]
    %v301 = vld [vmem:[%s289 + $0x2c] sm:$0xf]
    %v302 = vld [vmem:[%s289 + $0x30] sm:$0xf]
    %v303 = vld [vmem:[%s289 + $0x34] sm:$0xf]
    %v304 = vld [vmem:[%s289 + $0x38] sm:$0xf]
    %v305 = vld [vmem:[%s289 + $0x3c] sm:$0xf]
    %v322 = vunpack.c.l.b16 %v290
    %v323 = vunpack.c.l.b16 %v291
    %v324 = vunpack.c.l.b16 %v292
    %v325 = vunpack.c.l.b16 %v293
    %v326 = vunpack.c.l.b16 %v294
    %v327 = vunpack.c.l.b16 %v295
    %v328 = vunpack.c.l.b16 %v296
    %v329 = vunpack.c.l.b16 %v297
    %v330 = vunpack.c.l.b16 %v298
    %v331 = vunpack.c.l.b16 %v299
    %v332 = vunpack.c.l.b16 %v300
    %v333 = vunpack.c.l.b16 %v301
    %v334 = vunpack.c.l.b16 %v302
    %v335 = vunpack.c.l.b16 %v303
    %v336 = vunpack.c.l.b16 %v304
    %v337 = vunpack.c.l.b16 %v305
    %v338 = vpack.c.b16 %v323, %v322
    %v339 = vpack.c.b16 %v325, %v324
    %v340 = vpack.c.b16 %v327, %v326
    %v341 = vpack.c.b16 %v329, %v328
    %v342 = vpack.c.b16 %v331, %v330
    %v343 = vpack.c.b16 %v333, %v332
    %v344 = vpack.c.b16 %v335, %v334
    %v345 = vpack.c.b16 %v337, %v336
    %354 = vmatprep.subr.bf16.mxu0 0
    %355 = vmatpush1.bf16.msra.mxu0 %v345
    %356 = vmatprep.subr.bf16.mxu0 0
    %357 = vmatpush1.bf16.msra.mxu0 %v344
    %358 = vmatprep.subr.bf16.mxu0 0
    %359 = vmatpush1.bf16.msra.mxu0 %v343
    %360 = vmatprep.subr.bf16.mxu0 0
    %361 = vmatpush1.bf16.msra.mxu0 %v342
    %362 = vmatprep.subr.bf16.mxu0 0
    %363 = vmatpush1.bf16.msra.mxu0 %v341
    %364 = vmatprep.subr.bf16.mxu0 0
    %365 = vmatpush1.bf16.msra.mxu0 %v340
    %366 = vmatprep.subr.bf16.mxu0 0
    %367 = vmatpush1.bf16.msra.mxu0 %v339
    %368 = vmatprep.subr.bf16.mxu0 0
    %369 = vmatpush1.bf16.msra.mxu0 %v338
    %370 = vmatprep.subr.bf16.mxu0 0
    %371 = vmatpush2.bf16.msra.mxu0 0
    %372 = vmatprep.subr.bf16.mxu0 0
    %373 = vmatpush2.bf16.msra.mxu0 0
    %374 = vmatprep.subr.bf16.mxu0 0
    %375 = vmatpush2.bf16.msra.mxu0 0
    %376 = vmatprep.subr.bf16.mxu0 0
    %377 = vmatpush2.bf16.msra.mxu0 0
    %378 = vmatprep.subr.bf16.mxu0 0
    %379 = vmatpush2.bf16.msra.mxu0 0
    %380 = vmatprep.subr.bf16.mxu0 0
    %381 = vmatpush2.bf16.msra.mxu0 0
    %382 = vmatprep.subr.bf16.mxu0 0
    %383 = vmatpush2.bf16.msra.mxu0 0
    %384 = vmatprep.subr.bf16.mxu0 0
    %385 = vmatpush2.bf16.msra.mxu0 0
    %386 = vmatprep.mubr.bf16.mxu0 0
    %387 = vmatmul.mubr.bf16.gmra.mxu0 %v128
    %v388 = vpop.f32.mrf.mxu0
    %v389 = vadd.f32 0.0, %v388
    %v390 = vpop.f32.mrf.mxu0
    %v391 = vpop.f32.mrf.mxu0
    %v392 = vadd.f32 0.0, %v391
    %v393 = vpop.f32.mrf.mxu0
    %394 = vmatprep.mubr.bf16.mxu0 0
    %395 = vmatmul.mubr.bf16.gmra.mxu0 %v129
    %v396 = vpop.f32.mrf.mxu0
    %v397 = vadd.f32 0.0, %v396
    %v398 = vpop.f32.mrf.mxu0
    %v399 = vpop.f32.mrf.mxu0
    %v400 = vadd.f32 0.0, %v399
    %v401 = vpop.f32.mrf.mxu0
    %402 = vmatprep.mubr.bf16.mxu0 0
    %403 = vmatmul.mubr.bf16.gmra.mxu0 %v130
    %v404 = vpop.f32.mrf.mxu0
    %v405 = vadd.f32 0.0, %v404
    %v406 = vpop.f32.mrf.mxu0
    %v407 = vpop.f32.mrf.mxu0
    %v408 = vadd.f32 0.0, %v407
    %v409 = vpop.f32.mrf.mxu0
    %410 = vmatprep.mubr.bf16.mxu0 0
    %411 = vmatmul.mubr.bf16.gmra.mxu0 %v131
    %v412 = vpop.f32.mrf.mxu0
    %v413 = vadd.f32 0.0, %v412
    %v414 = vpop.f32.mrf.mxu0
    %v415 = vpop.f32.mrf.mxu0
    %v416 = vadd.f32 0.0, %v415
    %v417 = vpop.f32.mrf.mxu0
    %418 = vdwg.mxu0
    %v419 = vpack.c.bf16 %v392, %v389
    %v420 = vpack.c.bf16 %v400, %v397
    %v421 = vpack.c.bf16 %v408, %v405
    %v422 = vpack.c.bf16 %v416, %v413
    %v427 = vunpack.c.l.b16 %v419
    %v428 = vunpack.c.h.b16 %v419
    %v429 = vunpack.c.l.b16 %v420
    %v430 = vunpack.c.h.b16 %v420
    %v431 = vunpack.c.l.b16 %v421
    %v432 = vunpack.c.h.b16 %v421
    %v433 = vunpack.c.l.b16 %v422
    %v434 = vunpack.c.h.b16 %v422
    %v435 = vpack.c.b16 %v427, %v427
    %v436 = vpack.c.b16 %v428, %v428
    %v437 = vpack.c.b16 %v429, %v429
    %v438 = vpack.c.b16 %v430, %v430
    %v439 = vpack.c.b16 %v431, %v431
    %v440 = vpack.c.b16 %v432, %v432
    %v441 = vpack.c.b16 %v433, %v433
    %v442 = vpack.c.b16 %v434, %v434
    %451 = vst [vmem:[#allocation2 + $0x20] sm:$0xf] %v435
    %452 = vst [vmem:[#allocation2 + $0x24] sm:$0xf] %v436
    %453 = vst [vmem:[#allocation2 + $0x28] sm:$0xf] %v437
    %454 = vst [vmem:[#allocation2 + $0x2c] sm:$0xf] %v438
    %455 = vst [vmem:[#allocation2 + $0x30] sm:$0xf] %v439
    %456 = vst [vmem:[#allocation2 + $0x34] sm:$0xf] %v440
    %457 = vst [vmem:[#allocation2 + $0x38] sm:$0xf] %v441
    %458 = vst [vmem:[#allocation2 + $0x3c] sm:$0xf] %v442
    %s459 = scalar_lea.vmem [#allocation8], 128
    %v460 = vld [vmem:[%s459] sm:$0xf]
    %v461 = vld [vmem:[%s459 + $0x4] sm:$0xf]
    %v462 = vld [vmem:[%s459 + $0x8] sm:$0xf]
    %v463 = vld [vmem:[%s459 + $0xc] sm:$0xf]
    %v464 = vld [vmem:[%s459 + $0x10] sm:$0xf]
    %v465 = vld [vmem:[%s459 + $0x14] sm:$0xf]
    %v466 = vld [vmem:[%s459 + $0x18] sm:$0xf]
    %v467 = vld [vmem:[%s459 + $0x1c] sm:$0xf]
    %v468 = vld [vmem:[%s459 + $0x20] sm:$0xf]
    %v469 = vld [vmem:[%s459 + $0x24] sm:$0xf]
    %v470 = vld [vmem:[%s459 + $0x28] sm:$0xf]
    %v471 = vld [vmem:[%s459 + $0x2c] sm:$0xf]
    %v472 = vld [vmem:[%s459 + $0x30] sm:$0xf]
    %v473 = vld [vmem:[%s459 + $0x34] sm:$0xf]
    %v474 = vld [vmem:[%s459 + $0x38] sm:$0xf]
    %v475 = vld [vmem:[%s459 + $0x3c] sm:$0xf]
    %v492 = vunpack.c.l.b16 %v460
    %v493 = vunpack.c.l.b16 %v461
    %v494 = vunpack.c.l.b16 %v462
    %v495 = vunpack.c.l.b16 %v463
    %v496 = vunpack.c.l.b16 %v464
    %v497 = vunpack.c.l.b16 %v465
    %v498 = vunpack.c.l.b16 %v466
    %v499 = vunpack.c.l.b16 %v467
    %v500 = vunpack.c.l.b16 %v468
    %v501 = vunpack.c.l.b16 %v469
    %v502 = vunpack.c.l.b16 %v470
    %v503 = vunpack.c.l.b16 %v471
    %v504 = vunpack.c.l.b16 %v472
    %v505 = vunpack.c.l.b16 %v473
    %v506 = vunpack.c.l.b16 %v474
    %v507 = vunpack.c.l.b16 %v475
    %v508 = vpack.c.b16 %v493, %v492
    %v509 = vpack.c.b16 %v495, %v494
    %v510 = vpack.c.b16 %v497, %v496
    %v511 = vpack.c.b16 %v499, %v498
    %v512 = vpack.c.b16 %v501, %v500
    %v513 = vpack.c.b16 %v503, %v502
    %v514 = vpack.c.b16 %v505, %v504
    %v515 = vpack.c.b16 %v507, %v506
    %524 = vmatprep.subr.bf16.mxu0 0
    %525 = vmatpush1.bf16.msra.mxu0 %v515
    %526 = vmatprep.subr.bf16.mxu0 0
    %527 = vmatpush1.bf16.msra.mxu0 %v514
    %528 = vmatprep.subr.bf16.mxu0 0
    %529 = vmatpush1.bf16.msra.mxu0 %v513
    %530 = vmatprep.subr.bf16.mxu0 0
    %531 = vmatpush1.bf16.msra.mxu0 %v512
    %532 = vmatprep.subr.bf16.mxu0 0
    %533 = vmatpush1.bf16.msra.mxu0 %v511
    %534 = vmatprep.subr.bf16.mxu0 0
    %535 = vmatpush1.bf16.msra.mxu0 %v510
    %536 = vmatprep.subr.bf16.mxu0 0
    %537 = vmatpush1.bf16.msra.mxu0 %v509
    %538 = vmatprep.subr.bf16.mxu0 0
    %539 = vmatpush1.bf16.msra.mxu0 %v508
    %540 = vmatprep.subr.bf16.mxu0 0
    %541 = vmatpush2.bf16.msra.mxu0 0
    %542 = vmatprep.subr.bf16.mxu0 0
    %543 = vmatpush2.bf16.msra.mxu0 0
    %544 = vmatprep.subr.bf16.mxu0 0
    %545 = vmatpush2.bf16.msra.mxu0 0
    %546 = vmatprep.subr.bf16.mxu0 0
    %547 = vmatpush2.bf16.msra.mxu0 0
    %548 = vmatprep.subr.bf16.mxu0 0
    %549 = vmatpush2.bf16.msra.mxu0 0
    %550 = vmatprep.subr.bf16.mxu0 0
    %551 = vmatpush2.bf16.msra.mxu0 0
    %552 = vmatprep.subr.bf16.mxu0 0
    %553 = vmatpush2.bf16.msra.mxu0 0
    %554 = vmatprep.subr.bf16.mxu0 0
    %555 = vmatpush2.bf16.msra.mxu0 0
    %556 = vmatprep.mubr.bf16.mxu0 0
    %557 = vmatmul.mubr.bf16.gmra.mxu0 %v128
    %v558 = vpop.f32.mrf.mxu0
    %v559 = vadd.f32 0.0, %v558
    %v560 = vpop.f32.mrf.mxu0
    %v561 = vpop.f32.mrf.mxu0
    %v562 = vadd.f32 0.0, %v561
    %v563 = vpop.f32.mrf.mxu0
    %564 = vmatprep.mubr.bf16.mxu0 0
    %565 = vmatmul.mubr.bf16.gmra.mxu0 %v129
    %v566 = vpop.f32.mrf.mxu0
    %v567 = vadd.f32 0.0, %v566
    %v568 = vpop.f32.mrf.mxu0
    %v569 = vpop.f32.mrf.mxu0
    %v570 = vadd.f32 0.0, %v569
    %v571 = vpop.f32.mrf.mxu0
    %572 = vmatprep.mubr.bf16.mxu0 0
    %573 = vmatmul.mubr.bf16.gmra.mxu0 %v130
    %v574 = vpop.f32.mrf.mxu0
    %v575 = vadd.f32 0.0, %v574
    %v576 = vpop.f32.mrf.mxu0
    %v577 = vpop.f32.mrf.mxu0
    %v578 = vadd.f32 0.0, %v577
    %v579 = vpop.f32.mrf.mxu0
    %580 = vmatprep.mubr.bf16.mxu0 0
    %581 = vmatmul.mubr.bf16.gmra.mxu0 %v131
    %v582 = vpop.f32.mrf.mxu0
    %v583 = vadd.f32 0.0, %v582
    %v584 = vpop.f32.mrf.mxu0
    %v585 = vpop.f32.mrf.mxu0
    %v586 = vadd.f32 0.0, %v585
    %v587 = vpop.f32.mrf.mxu0
    %588 = vdwg.mxu0
    %v589 = vpack.c.bf16 %v562, %v559
    %v590 = vpack.c.bf16 %v570, %v567
    %v591 = vpack.c.bf16 %v578, %v575
    %v592 = vpack.c.bf16 %v586, %v583
    %v597 = vunpack.c.l.b16 %v589
    %v598 = vunpack.c.h.b16 %v589
    %v599 = vunpack.c.l.b16 %v590
    %v600 = vunpack.c.h.b16 %v590
    %v601 = vunpack.c.l.b16 %v591
    %v602 = vunpack.c.h.b16 %v591
    %v603 = vunpack.c.l.b16 %v592
    %v604 = vunpack.c.h.b16 %v592
    %v605 = vpack.c.b16 %v597, %v597
    %v606 = vpack.c.b16 %v598, %v598
    %v607 = vpack.c.b16 %v599, %v599
    %v608 = vpack.c.b16 %v600, %v600
    %v609 = vpack.c.b16 %v601, %v601
    %v610 = vpack.c.b16 %v602, %v602
    %v611 = vpack.c.b16 %v603, %v603
    %v612 = vpack.c.b16 %v604, %v604
    %621 = vst [vmem:[#allocation2 + $0x40] sm:$0xf] %v605
    %622 = vst [vmem:[#allocation2 + $0x44] sm:$0xf] %v606
    %623 = vst [vmem:[#allocation2 + $0x48] sm:$0xf] %v607
    %624 = vst [vmem:[#allocation2 + $0x4c] sm:$0xf] %v608
    %625 = vst [vmem:[#allocation2 + $0x50] sm:$0xf] %v609
    %626 = vst [vmem:[#allocation2 + $0x54] sm:$0xf] %v610
    %627 = vst [vmem:[#allocation2 + $0x58] sm:$0xf] %v611
    %628 = vst [vmem:[#allocation2 + $0x5c] sm:$0xf] %v612
    %s629 = scalar_lea.vmem [#allocation8], 192
    %v630 = vld [vmem:[%s629] sm:$0xf]
    %v631 = vld [vmem:[%s629 + $0x4] sm:$0xf]
    %v632 = vld [vmem:[%s629 + $0x8] sm:$0xf]
    %v633 = vld [vmem:[%s629 + $0xc] sm:$0xf]
    %v634 = vld [vmem:[%s629 + $0x10] sm:$0xf]
    %v635 = vld [vmem:[%s629 + $0x14] sm:$0xf]
    %v636 = vld [vmem:[%s629 + $0x18] sm:$0xf]
    %v637 = vld [vmem:[%s629 + $0x1c] sm:$0xf]
    %v638 = vld [vmem:[%s629 + $0x20] sm:$0xf]
    %v639 = vld [vmem:[%s629 + $0x24] sm:$0xf]
    %v640 = vld [vmem:[%s629 + $0x28] sm:$0xf]
    %v641 = vld [vmem:[%s629 + $0x2c] sm:$0xf]
    %v642 = vld [vmem:[%s629 + $0x30] sm:$0xf]
    %v643 = vld [vmem:[%s629 + $0x34] sm:$0xf]
    %v644 = vld [vmem:[%s629 + $0x38] sm:$0xf]
    %v645 = vld [vmem:[%s629 + $0x3c] sm:$0xf]
    %v662 = vunpack.c.l.b16 %v630
    %v663 = vunpack.c.l.b16 %v631
    %v664 = vunpack.c.l.b16 %v632
    %v665 = vunpack.c.l.b16 %v633
    %v666 = vunpack.c.l.b16 %v634
    %v667 = vunpack.c.l.b16 %v635
    %v668 = vunpack.c.l.b16 %v636
    %v669 = vunpack.c.l.b16 %v637
    %v670 = vunpack.c.l.b16 %v638
    %v671 = vunpack.c.l.b16 %v639
    %v672 = vunpack.c.l.b16 %v640
    %v673 = vunpack.c.l.b16 %v641
    %v674 = vunpack.c.l.b16 %v642
    %v675 = vunpack.c.l.b16 %v643
    %v676 = vunpack.c.l.b16 %v644
    %v677 = vunpack.c.l.b16 %v645
    %v678 = vpack.c.b16 %v663, %v662
    %v679 = vpack.c.b16 %v665, %v664
    %v680 = vpack.c.b16 %v667, %v666
    %v681 = vpack.c.b16 %v669, %v668
    %v682 = vpack.c.b16 %v671, %v670
    %v683 = vpack.c.b16 %v673, %v672
    %v684 = vpack.c.b16 %v675, %v674
    %v685 = vpack.c.b16 %v677, %v676
    %694 = vmatprep.subr.bf16.mxu0 0
    %695 = vmatpush1.bf16.msra.mxu0 %v685
    %696 = vmatprep.subr.bf16.mxu0 0
    %697 = vmatpush1.bf16.msra.mxu0 %v684
    %698 = vmatprep.subr.bf16.mxu0 0
    %699 = vmatpush1.bf16.msra.mxu0 %v683
    %700 = vmatprep.subr.bf16.mxu0 0
    %701 = vmatpush1.bf16.msra.mxu0 %v682
    %702 = vmatprep.subr.bf16.mxu0 0
    %703 = vmatpush1.bf16.msra.mxu0 %v681
    %704 = vmatprep.subr.bf16.mxu0 0
    %705 = vmatpush1.bf16.msra.mxu0 %v680
    %706 = vmatprep.subr.bf16.mxu0 0
    %707 = vmatpush1.bf16.msra.mxu0 %v679
    %708 = vmatprep.subr.bf16.mxu0 0
    %709 = vmatpush1.bf16.msra.mxu0 %v678
    %710 = vmatprep.subr.bf16.mxu0 0
    %711 = vmatpush2.bf16.msra.mxu0 0
    %712 = vmatprep.subr.bf16.mxu0 0
    %713 = vmatpush2.bf16.msra.mxu0 0
    %714 = vmatprep.subr.bf16.mxu0 0
    %715 = vmatpush2.bf16.msra.mxu0 0
    %716 = vmatprep.subr.bf16.mxu0 0
    %717 = vmatpush2.bf16.msra.mxu0 0
    %718 = vmatprep.subr.bf16.mxu0 0
    %719 = vmatpush2.bf16.msra.mxu0 0
    %720 = vmatprep.subr.bf16.mxu0 0
    %721 = vmatpush2.bf16.msra.mxu0 0
    %722 = vmatprep.subr.bf16.mxu0 0
    %723 = vmatpush2.bf16.msra.mxu0 0
    %724 = vmatprep.subr.bf16.mxu0 0
    %725 = vmatpush2.bf16.msra.mxu0 0
    %726 = vmatprep.mubr.bf16.mxu0 0
    %727 = vmatmul.mubr.bf16.gmra.mxu0 %v128
    %v728 = vpop.f32.mrf.mxu0
    %v729 = vadd.f32 0.0, %v728
    %v730 = vpop.f32.mrf.mxu0
    %v731 = vpop.f32.mrf.mxu0
    %v732 = vadd.f32 0.0, %v731
    %v733 = vpop.f32.mrf.mxu0
    %734 = vmatprep.mubr.bf16.mxu0 0
    %735 = vmatmul.mubr.bf16.gmra.mxu0 %v129
    %v736 = vpop.f32.mrf.mxu0
    %v737 = vadd.f32 0.0, %v736
    %v738 = vpop.f32.mrf.mxu0
    %v739 = vpop.f32.mrf.mxu0
    %v740 = vadd.f32 0.0, %v739
    %v741 = vpop.f32.mrf.mxu0
    %742 = vmatprep.mubr.bf16.mxu0 0
    %743 = vmatmul.mubr.bf16.gmra.mxu0 %v130
    %v744 = vpop.f32.mrf.mxu0
    %v745 = vadd.f32 0.0, %v744
    %v746 = vpop.f32.mrf.mxu0
    %v747 = vpop.f32.mrf.mxu0
    %v748 = vadd.f32 0.0, %v747
    %v749 = vpop.f32.mrf.mxu0
    %750 = vmatprep.mubr.bf16.mxu0 0
    %751 = vmatmul.mubr.bf16.gmra.mxu0 %v131
    %v752 = vpop.f32.mrf.mxu0
    %v753 = vadd.f32 0.0, %v752
    %v754 = vpop.f32.mrf.mxu0
    %v755 = vpop.f32.mrf.mxu0
    %v756 = vadd.f32 0.0, %v755
    %v757 = vpop.f32.mrf.mxu0
    %758 = vdwg.mxu0
    %v759 = vpack.c.bf16 %v732, %v729
    %v760 = vpack.c.bf16 %v740, %v737
    %v761 = vpack.c.bf16 %v748, %v745
    %v762 = vpack.c.bf16 %v756, %v753
    %v767 = vunpack.c.l.b16 %v759
    %v768 = vunpack.c.h.b16 %v759
    %v769 = vunpack.c.l.b16 %v760
    %v770 = vunpack.c.h.b16 %v760
    %v771 = vunpack.c.l.b16 %v761
    %v772 = vunpack.c.h.b16 %v761
    %v773 = vunpack.c.l.b16 %v762
    %v774 = vunpack.c.h.b16 %v762
    %v775 = vpack.c.b16 %v767, %v767
    %v776 = vpack.c.b16 %v768, %v768
    %v777 = vpack.c.b16 %v769, %v769
    %v778 = vpack.c.b16 %v770, %v770
    %v779 = vpack.c.b16 %v771, %v771
    %v780 = vpack.c.b16 %v772, %v772
    %v781 = vpack.c.b16 %v773, %v773
    %v782 = vpack.c.b16 %v774, %v774
    %791 = vst [vmem:[#allocation2 + $0x60] sm:$0xf] %v775
    %792 = vst [vmem:[#allocation2 + $0x64] sm:$0xf] %v776
    %793 = vst [vmem:[#allocation2 + $0x68] sm:$0xf] %v777
    %794 = vst [vmem:[#allocation2 + $0x6c] sm:$0xf] %v778
    %795 = vst [vmem:[#allocation2 + $0x70] sm:$0xf] %v779
    %796 = vst [vmem:[#allocation2 + $0x74] sm:$0xf] %v780
    %797 = vst [vmem:[#allocation2 + $0x78] sm:$0xf] %v781
    %798 = vst [vmem:[#allocation2 + $0x7c] sm:$0xf] %v782
    %v799 = vld [vmem:[#allocation2] sm:$0xf]
    %v800 = vld [vmem:[#allocation2 + $0x4] sm:$0xf]
    %v801 = vld [vmem:[#allocation2 + $0x8] sm:$0xf]
    %v802 = vld [vmem:[#allocation2 + $0xc] sm:$0xf]
    %v803 = vld [vmem:[#allocation2 + $0x10] sm:$0xf]
    %v804 = vld [vmem:[#allocation2 + $0x14] sm:$0xf]
    %v805 = vld [vmem:[#allocation2 + $0x18] sm:$0xf]
    %v806 = vld [vmem:[#allocation2 + $0x1c] sm:$0xf]
    %v807 = vld [vmem:[#allocation2 + $0x20] sm:$0xf]
    %v808 = vld [vmem:[#allocation2 + $0x24] sm:$0xf]
    %v809 = vld [vmem:[#allocation2 + $0x28] sm:$0xf]
    %v810 = vld [vmem:[#allocation2 + $0x2c] sm:$0xf]
    %v811 = vld [vmem:[#allocation2 + $0x30] sm:$0xf]
    %v812 = vld [vmem:[#allocation2 + $0x34] sm:$0xf]
    %v813 = vld [vmem:[#allocation2 + $0x38] sm:$0xf]
    %v814 = vld [vmem:[#allocation2 + $0x3c] sm:$0xf]
    %v815 = vld [vmem:[#allocation2 + $0x40] sm:$0xf]
    %v816 = vld [vmem:[#allocation2 + $0x44] sm:$0xf]
    %v817 = vld [vmem:[#allocation2 + $0x48] sm:$0xf]
    %v818 = vld [vmem:[#allocation2 + $0x4c] sm:$0xf]
    %v819 = vld [vmem:[#allocation2 + $0x50] sm:$0xf]
    %v820 = vld [vmem:[#allocation2 + $0x54] sm:$0xf]
    %v821 = vld [vmem:[#allocation2 + $0x58] sm:$0xf]
    %v822 = vld [vmem:[#allocation2 + $0x5c] sm:$0xf]
    %v823 = vld [vmem:[#allocation2 + $0x60] sm:$0xf]
    %v824 = vld [vmem:[#allocation2 + $0x64] sm:$0xf]
    %v825 = vld [vmem:[#allocation2 + $0x68] sm:$0xf]
    %v826 = vld [vmem:[#allocation2 + $0x6c] sm:$0xf]
    %v827 = vld [vmem:[#allocation2 + $0x70] sm:$0xf]
    %v828 = vld [vmem:[#allocation2 + $0x74] sm:$0xf]
    %v829 = vld [vmem:[#allocation2 + $0x78] sm:$0xf]
    %v830 = vld [vmem:[#allocation2 + $0x7c] sm:$0xf]
    %v831 = vld [vmem:[%s3] sm:$0x1]
    %v833 = vlaneseq
    %v834 = vshrl.u32 %v833, 7
    %v835 = vsub.s32 0, %v834
    %v836 = vrot.slane %v831, %v835
    %v846 = vunpack.c.l.b16 %v80
    %v847 = vunpack.c.h.b16 %v80
    %v848 = vunpack.c.l.b16 %v81
    %v849 = vunpack.c.h.b16 %v81
    %v850 = vunpack.c.l.b16 %v82
    %v851 = vunpack.c.h.b16 %v82
    %v852 = vunpack.c.l.b16 %v83
    %v853 = vunpack.c.h.b16 %v83
    %v854 = vunpack.c.l.b16 %v84
    %v855 = vunpack.c.h.b16 %v84
    %v856 = vunpack.c.l.b16 %v85
    %v857 = vunpack.c.h.b16 %v85
    %v858 = vunpack.c.l.b16 %v86
    %v859 = vunpack.c.h.b16 %v86
    %v860 = vunpack.c.l.b16 %v87
    %v861 = vunpack.c.h.b16 %v87
    %v862 = vpack.c.b16 %v848, %v846
    %v863 = vpack.c.b16 %v849, %v847
    %v864 = vpack.c.b16 %v852, %v850
    %v865 = vpack.c.b16 %v853, %v851
    %v866 = vpack.c.b16 %v856, %v854
    %v867 = vpack.c.b16 %v857, %v855
    %v868 = vpack.c.b16 %v860, %v858
    %v869 = vpack.c.b16 %v861, %v859
    %v910 = vunpack.c.l.b16 %v799
    %v911 = vunpack.c.l.b16 %v800
    %v912 = vunpack.c.l.b16 %v801
    %v913 = vunpack.c.l.b16 %v802
    %v914 = vunpack.c.l.b16 %v803
    %v915 = vunpack.c.l.b16 %v804
    %v916 = vunpack.c.l.b16 %v805
    %v917 = vunpack.c.l.b16 %v806
    %v918 = vunpack.c.l.b16 %v807
    %v919 = vunpack.c.l.b16 %v808
    %v920 = vunpack.c.l.b16 %v809
    %v921 = vunpack.c.l.b16 %v810
    %v922 = vunpack.c.l.b16 %v811
    %v923 = vunpack.c.l.b16 %v812
    %v924 = vunpack.c.l.b16 %v813
    %v925 = vunpack.c.l.b16 %v814
    %v926 = vunpack.c.l.b16 %v815
    %v927 = vunpack.c.l.b16 %v816
    %v928 = vunpack.c.l.b16 %v817
    %v929 = vunpack.c.l.b16 %v818
    %v930 = vunpack.c.l.b16 %v819
    %v931 = vunpack.c.l.b16 %v820
    %v932 = vunpack.c.l.b16 %v821
    %v933 = vunpack.c.l.b16 %v822
    %v934 = vunpack.c.l.b16 %v823
    %v935 = vunpack.c.l.b16 %v824
    %v936 = vunpack.c.l.b16 %v825
    %v937 = vunpack.c.l.b16 %v826
    %v938 = vunpack.c.l.b16 %v827
    %v939 = vunpack.c.l.b16 %v828
    %v940 = vunpack.c.l.b16 %v829
    %v941 = vunpack.c.l.b16 %v830
    %v942 = vpack.c.b16 %v911, %v910
    %v943 = vpack.c.b16 %v913, %v912
    %v944 = vpack.c.b16 %v915, %v914
    %v945 = vpack.c.b16 %v917, %v916
    %v946 = vpack.c.b16 %v919, %v918
    %v947 = vpack.c.b16 %v921, %v920
    %v948 = vpack.c.b16 %v923, %v922
    %v949 = vpack.c.b16 %v925, %v924
    %v950 = vpack.c.b16 %v927, %v926
    %v951 = vpack.c.b16 %v929, %v928
    %v952 = vpack.c.b16 %v931, %v930
    %v953 = vpack.c.b16 %v933, %v932
    %v954 = vpack.c.b16 %v935, %v934
    %v955 = vpack.c.b16 %v937, %v936
    %v956 = vpack.c.b16 %v939, %v938
    %v957 = vpack.c.b16 %v941, %v940
    %974 = vmatprep.subr.bf16.mxu0 0
    %975 = vmatpush1.bf16.msra.mxu0 %v949
    %976 = vmatprep.subr.bf16.mxu0 0
    %977 = vmatpush1.bf16.msra.mxu0 %v948
    %978 = vmatprep.subr.bf16.mxu0 0
    %979 = vmatpush1.bf16.msra.mxu0 %v947
    %980 = vmatprep.subr.bf16.mxu0 0
    %981 = vmatpush1.bf16.msra.mxu0 %v946
    %982 = vmatprep.subr.bf16.mxu0 0
    %983 = vmatpush1.bf16.msra.mxu0 %v945
    %984 = vmatprep.subr.bf16.mxu0 0
    %985 = vmatpush1.bf16.msra.mxu0 %v944
    %986 = vmatprep.subr.bf16.mxu0 0
    %987 = vmatpush1.bf16.msra.mxu0 %v943
    %988 = vmatprep.subr.bf16.mxu0 0
    %989 = vmatpush1.bf16.msra.mxu0 %v942
    %990 = vmatprep.subr.bf16.mxu0 0
    %991 = vmatpush2.bf16.msra.mxu0 %v957
    %992 = vmatprep.subr.bf16.mxu0 0
    %993 = vmatpush2.bf16.msra.mxu0 %v956
    %994 = vmatprep.subr.bf16.mxu0 0
    %995 = vmatpush2.bf16.msra.mxu0 %v955
    %996 = vmatprep.subr.bf16.mxu0 0
    %997 = vmatpush2.bf16.msra.mxu0 %v954
    %998 = vmatprep.subr.bf16.mxu0 0
    %999 = vmatpush2.bf16.msra.mxu0 %v953
    %1000 = vmatprep.subr.bf16.mxu0 0
    %1001 = vmatpush2.bf16.msra.mxu0 %v952
    %1002 = vmatprep.subr.bf16.mxu0 0
    %1003 = vmatpush2.bf16.msra.mxu0 %v951
    %1004 = vmatprep.subr.bf16.mxu0 0
    %1005 = vmatpush2.bf16.msra.mxu0 %v950
    %1006 = vmatprep.mubr.bf16.mxu0 %v863
    %1007 = vmatmul.mubr.bf16.gmra.mxu0 %v862
    %v1008 = vpop.f32.mrf.mxu0
    %v1009 = vadd.f32 %v836, %v1008
    %v1010 = vpop.f32.mrf.mxu0
    %v1011 = vpop.f32.mrf.mxu0
    %v1012 = vadd.f32 %v836, %v1011
    %v1013 = vpop.f32.mrf.mxu0
    %1014 = vmatprep.mubr.bf16.mxu0 %v865
    %1015 = vmatmul.mubr.bf16.gmra.mxu0 %v864
    %v1016 = vpop.f32.mrf.mxu0
    %v1017 = vadd.f32 %v836, %v1016
    %v1018 = vpop.f32.mrf.mxu0
    %v1019 = vpop.f32.mrf.mxu0
    %v1020 = vadd.f32 %v836, %v1019
    %v1021 = vpop.f32.mrf.mxu0
    %1022 = vmatprep.mubr.bf16.mxu0 %v867
    %1023 = vmatmul.mubr.bf16.gmra.mxu0 %v866
    %v1024 = vpop.f32.mrf.mxu0
    %v1025 = vadd.f32 %v836, %v1024
    %v1026 = vpop.f32.mrf.mxu0
    %v1027 = vpop.f32.mrf.mxu0
    %v1028 = vadd.f32 %v836, %v1027
    %v1029 = vpop.f32.mrf.mxu0
    %1030 = vmatprep.mubr.bf16.mxu0 %v869
    %1031 = vmatmul.mubr.bf16.gmra.mxu0 %v868
    %v1032 = vpop.f32.mrf.mxu0
    %v1033 = vadd.f32 %v836, %v1032
    %v1034 = vpop.f32.mrf.mxu0
    %v1035 = vpop.f32.mrf.mxu0
    %v1036 = vadd.f32 %v836, %v1035
    %v1037 = vpop.f32.mrf.mxu0
    %1038 = vdwg.mxu0
    %v1039 = vmax.f32 %v1009, 0.0
    %v1040 = vmax.f32 %v1012, 0.0
    %v1041 = vmax.f32 %v1017, 0.0
    %v1042 = vmax.f32 %v1020, 0.0
    %v1043 = vmax.f32 %v1025, 0.0
    %v1044 = vmax.f32 %v1028, 0.0
    %v1045 = vmax.f32 %v1033, 0.0
    %v1046 = vmax.f32 %v1036, 0.0
    %v1047 = vpack.c.bf16 %v1040, %v1039
    %v1048 = vpack.c.bf16 %v1042, %v1041
    %v1049 = vpack.c.bf16 %v1044, %v1043
    %v1050 = vpack.c.bf16 %v1046, %v1045
    %v1051 = vld [vmem:[#allocation9] sm:$0xf]
    %v1052 = vld [vmem:[#allocation9 + $0x4] sm:$0xf]
    %v1053 = vld [vmem:[#allocation9 + $0x8] sm:$0xf]
    %v1054 = vld [vmem:[#allocation9 + $0xc] sm:$0xf]
    %v1055 = vld [vmem:[#allocation9 + $0x10] sm:$0xf]
    %v1056 = vld [vmem:[#allocation9 + $0x14] sm:$0xf]
    %v1057 = vld [vmem:[#allocation9 + $0x18] sm:$0xf]
    %v1058 = vld [vmem:[#allocation9 + $0x1c] sm:$0xf]
    %v1059 = vld [vmem:[#allocation9 + $0x20] sm:$0xf]
    %v1060 = vld [vmem:[#allocation9 + $0x24] sm:$0xf]
    %v1061 = vld [vmem:[#allocation9 + $0x28] sm:$0xf]
    %v1062 = vld [vmem:[#allocation9 + $0x2c] sm:$0xf]
    %v1063 = vld [vmem:[#allocation9 + $0x30] sm:$0xf]
    %v1064 = vld [vmem:[#allocation9 + $0x34] sm:$0xf]
    %v1065 = vld [vmem:[#allocation9 + $0x38] sm:$0xf]
    %v1066 = vld [vmem:[#allocation9 + $0x3c] sm:$0xf]
    %v1083 = vunpack.c.l.b16 %v1051
    %v1084 = vunpack.c.l.b16 %v1052
    %v1085 = vunpack.c.l.b16 %v1053
    %v1086 = vunpack.c.l.b16 %v1054
    %v1087 = vunpack.c.l.b16 %v1055
    %v1088 = vunpack.c.l.b16 %v1056
    %v1089 = vunpack.c.l.b16 %v1057
    %v1090 = vunpack.c.l.b16 %v1058
    %v1091 = vunpack.c.l.b16 %v1059
    %v1092 = vunpack.c.l.b16 %v1060
    %v1093 = vunpack.c.l.b16 %v1061
    %v1094 = vunpack.c.l.b16 %v1062
    %v1095 = vunpack.c.l.b16 %v1063
    %v1096 = vunpack.c.l.b16 %v1064
    %v1097 = vunpack.c.l.b16 %v1065
    %v1098 = vunpack.c.l.b16 %v1066
    %v1099 = vpack.c.b16 %v1084, %v1083
    %v1100 = vpack.c.b16 %v1086, %v1085
    %v1101 = vpack.c.b16 %v1088, %v1087
    %v1102 = vpack.c.b16 %v1090, %v1089
    %v1103 = vpack.c.b16 %v1092, %v1091
    %v1104 = vpack.c.b16 %v1094, %v1093
    %v1105 = vpack.c.b16 %v1096, %v1095
    %v1106 = vpack.c.b16 %v1098, %v1097
    %1115 = vmatprep.subr.bf16.mxu0 0
    %1116 = vmatpush1.bf16.msra.mxu0 %v1106
    %1117 = vmatprep.subr.bf16.mxu0 0
    %1118 = vmatpush1.bf16.msra.mxu0 %v1105
    %1119 = vmatprep.subr.bf16.mxu0 0
    %1120 = vmatpush1.bf16.msra.mxu0 %v1104
    %1121 = vmatprep.subr.bf16.mxu0 0
    %1122 = vmatpush1.bf16.msra.mxu0 %v1103
    %1123 = vmatprep.subr.bf16.mxu0 0
    %1124 = vmatpush1.bf16.msra.mxu0 %v1102
    %1125 = vmatprep.subr.bf16.mxu0 0
    %1126 = vmatpush1.bf16.msra.mxu0 %v1101
    %1127 = vmatprep.subr.bf16.mxu0 0
    %1128 = vmatpush1.bf16.msra.mxu0 %v1100
    %1129 = vmatprep.subr.bf16.mxu0 0
    %1130 = vmatpush1.bf16.msra.mxu0 %v1099
    %1131 = vmatprep.subr.bf16.mxu0 0
    %1132 = vmatpush2.bf16.msra.mxu0 0
    %1133 = vmatprep.subr.bf16.mxu0 0
    %1134 = vmatpush2.bf16.msra.mxu0 0
    %1135 = vmatprep.subr.bf16.mxu0 0
    %1136 = vmatpush2.bf16.msra.mxu0 0
    %1137 = vmatprep.subr.bf16.mxu0 0
    %1138 = vmatpush2.bf16.msra.mxu0 0
    %1139 = vmatprep.subr.bf16.mxu0 0
    %1140 = vmatpush2.bf16.msra.mxu0 0
    %1141 = vmatprep.subr.bf16.mxu0 0
    %1142 = vmatpush2.bf16.msra.mxu0 0
    %1143 = vmatprep.subr.bf16.mxu0 0
    %1144 = vmatpush2.bf16.msra.mxu0 0
    %1145 = vmatprep.subr.bf16.mxu0 0
    %1146 = vmatpush2.bf16.msra.mxu0 0
    %1147 = vmatprep.mubr.bf16.mxu0 0
    %1148 = vmatmul.mubr.bf16.gmra.mxu0 %v1047
    %v1149 = vpop.f32.mrf.mxu0
    %v1150 = vadd.f32 0.0, %v1149
    %v1151 = vpop.f32.mrf.mxu0
    %v1152 = vpop.f32.mrf.mxu0
    %v1153 = vadd.f32 0.0, %v1152
    %v1154 = vpop.f32.mrf.mxu0
    %1155 = vmatprep.mubr.bf16.mxu0 0
    %1156 = vmatmul.mubr.bf16.gmra.mxu0 %v1048
    %v1157 = vpop.f32.mrf.mxu0
    %v1158 = vadd.f32 0.0, %v1157
    %v1159 = vpop.f32.mrf.mxu0
    %v1160 = vpop.f32.mrf.mxu0
    %v1161 = vadd.f32 0.0, %v1160
    %v1162 = vpop.f32.mrf.mxu0
    %1163 = vmatprep.mubr.bf16.mxu0 0
    %1164 = vmatmul.mubr.bf16.gmra.mxu0 %v1049
    %v1165 = vpop.f32.mrf.mxu0
    %v1166 = vadd.f32 0.0, %v1165
    %v1167 = vpop.f32.mrf.mxu0
    %v1168 = vpop.f32.mrf.mxu0
    %v1169 = vadd.f32 0.0, %v1168
    %v1170 = vpop.f32.mrf.mxu0
    %1171 = vmatprep.mubr.bf16.mxu0 0
    %1172 = vmatmul.mubr.bf16.gmra.mxu0 %v1050
    %v1173 = vpop.f32.mrf.mxu0
    %v1174 = vadd.f32 0.0, %v1173
    %v1175 = vpop.f32.mrf.mxu0
    %v1176 = vpop.f32.mrf.mxu0
    %v1177 = vadd.f32 0.0, %v1176
    %v1178 = vpop.f32.mrf.mxu0
    %1179 = vdwg.mxu0
    %v1180 = vpack.c.bf16 %v1153, %v1150
    %v1181 = vpack.c.bf16 %v1161, %v1158
    %v1182 = vpack.c.bf16 %v1169, %v1166
    %v1183 = vpack.c.bf16 %v1177, %v1174
    %v1188 = vunpack.c.l.b16 %v1180
    %v1189 = vunpack.c.h.b16 %v1180
    %v1190 = vunpack.c.l.b16 %v1181
    %v1191 = vunpack.c.h.b16 %v1181
    %v1192 = vunpack.c.l.b16 %v1182
    %v1193 = vunpack.c.h.b16 %v1182
    %v1194 = vunpack.c.l.b16 %v1183
    %v1195 = vunpack.c.h.b16 %v1183
    %v1196 = vpack.c.b16 %v1188, %v1188
    %v1197 = vpack.c.b16 %v1189, %v1189
    %v1198 = vpack.c.b16 %v1190, %v1190
    %v1199 = vpack.c.b16 %v1191, %v1191
    %v1200 = vpack.c.b16 %v1192, %v1192
    %v1201 = vpack.c.b16 %v1193, %v1193
    %v1202 = vpack.c.b16 %v1194, %v1194
    %v1203 = vpack.c.b16 %v1195, %v1195
    %1212 = vst [vmem:[#allocation2] sm:$0xf] %v1196
    %1213 = vst [vmem:[#allocation2 + $0x4] sm:$0xf] %v1197
    %1214 = vst [vmem:[#allocation2 + $0x8] sm:$0xf] %v1198
    %1215 = vst [vmem:[#allocation2 + $0xc] sm:$0xf] %v1199
    %1216 = vst [vmem:[#allocation2 + $0x10] sm:$0xf] %v1200
    %1217 = vst [vmem:[#allocation2 + $0x14] sm:$0xf] %v1201
    %1218 = vst [vmem:[#allocation2 + $0x18] sm:$0xf] %v1202
    %1219 = vst [vmem:[#allocation2 + $0x1c] sm:$0xf] %v1203
    %s1220 = scalar_lea.vmem [#allocation9], 64
    %v1221 = vld [vmem:[%s1220] sm:$0xf]
    %v1222 = vld [vmem:[%s1220 + $0x4] sm:$0xf]
    %v1223 = vld [vmem:[%s1220 + $0x8] sm:$0xf]
    %v1224 = vld [vmem:[%s1220 + $0xc] sm:$0xf]
    %v1225 = vld [vmem:[%s1220 + $0x10] sm:$0xf]
    %v1226 = vld [vmem:[%s1220 + $0x14] sm:$0xf]
    %v1227 = vld [vmem:[%s1220 + $0x18] sm:$0xf]
    %v1228 = vld [vmem:[%s1220 + $0x1c] sm:$0xf]
    %v1229 = vld [vmem:[%s1220 + $0x20] sm:$0xf]
    %v1230 = vld [vmem:[%s1220 + $0x24] sm:$0xf]
    %v1231 = vld [vmem:[%s1220 + $0x28] sm:$0xf]
    %v1232 = vld [vmem:[%s1220 + $0x2c] sm:$0xf]
    %v1233 = vld [vmem:[%s1220 + $0x30] sm:$0xf]
    %v1234 = vld [vmem:[%s1220 + $0x34] sm:$0xf]
    %v1235 = vld [vmem:[%s1220 + $0x38] sm:$0xf]
    %v1236 = vld [vmem:[%s1220 + $0x3c] sm:$0xf]
    %v1253 = vunpack.c.l.b16 %v1221
    %v1254 = vunpack.c.l.b16 %v1222
    %v1255 = vunpack.c.l.b16 %v1223
    %v1256 = vunpack.c.l.b16 %v1224
    %v1257 = vunpack.c.l.b16 %v1225
    %v1258 = vunpack.c.l.b16 %v1226
    %v1259 = vunpack.c.l.b16 %v1227
    %v1260 = vunpack.c.l.b16 %v1228
    %v1261 = vunpack.c.l.b16 %v1229
    %v1262 = vunpack.c.l.b16 %v1230
    %v1263 = vunpack.c.l.b16 %v1231
    %v1264 = vunpack.c.l.b16 %v1232
    %v1265 = vunpack.c.l.b16 %v1233
    %v1266 = vunpack.c.l.b16 %v1234
    %v1267 = vunpack.c.l.b16 %v1235
    %v1268 = vunpack.c.l.b16 %v1236
    %v1269 = vpack.c.b16 %v1254, %v1253
    %v1270 = vpack.c.b16 %v1256, %v1255
    %v1271 = vpack.c.b16 %v1258, %v1257
    %v1272 = vpack.c.b16 %v1260, %v1259
    %v1273 = vpack.c.b16 %v1262, %v1261
    %v1274 = vpack.c.b16 %v1264, %v1263
    %v1275 = vpack.c.b16 %v1266, %v1265
    %v1276 = vpack.c.b16 %v1268, %v1267
    %1285 = vmatprep.subr.bf16.mxu0 0
    %1286 = vmatpush1.bf16.msra.mxu0 %v1276
    %1287 = vmatprep.subr.bf16.mxu0 0
    %1288 = vmatpush1.bf16.msra.mxu0 %v1275
    %1289 = vmatprep.subr.bf16.mxu0 0
    %1290 = vmatpush1.bf16.msra.mxu0 %v1274
    %1291 = vmatprep.subr.bf16.mxu0 0
    %1292 = vmatpush1.bf16.msra.mxu0 %v1273
    %1293 = vmatprep.subr.bf16.mxu0 0
    %1294 = vmatpush1.bf16.msra.mxu0 %v1272
    %1295 = vmatprep.subr.bf16.mxu0 0
    %1296 = vmatpush1.bf16.msra.mxu0 %v1271
    %1297 = vmatprep.subr.bf16.mxu0 0
    %1298 = vmatpush1.bf16.msra.mxu0 %v1270
    %1299 = vmatprep.subr.bf16.mxu0 0
    %1300 = vmatpush1.bf16.msra.mxu0 %v1269
    %1301 = vmatprep.subr.bf16.mxu0 0
    %1302 = vmatpush2.bf16.msra.mxu0 0
    %1303 = vmatprep.subr.bf16.mxu0 0
    %1304 = vmatpush2.bf16.msra.mxu0 0
    %1305 = vmatprep.subr.bf16.mxu0 0
    %1306 = vmatpush2.bf16.msra.mxu0 0
    %1307 = vmatprep.subr.bf16.mxu0 0
    %1308 = vmatpush2.bf16.msra.mxu0 0
    %1309 = vmatprep.subr.bf16.mxu0 0
    %1310 = vmatpush2.bf16.msra.mxu0 0
    %1311 = vmatprep.subr.bf16.mxu0 0
    %1312 = vmatpush2.bf16.msra.mxu0 0
    %1313 = vmatprep.subr.bf16.mxu0 0
    %1314 = vmatpush2.bf16.msra.mxu0 0
    %1315 = vmatprep.subr.bf16.mxu0 0
    %1316 = vmatpush2.bf16.msra.mxu0 0
    %1317 = vmatprep.mubr.bf16.mxu0 0
    %1318 = vmatmul.mubr.bf16.gmra.mxu0 %v1047
    %v1319 = vpop.f32.mrf.mxu0
    %v1320 = vadd.f32 0.0, %v1319
    %v1321 = vpop.f32.mrf.mxu0
    %v1322 = vpop.f32.mrf.mxu0
    %v1323 = vadd.f32 0.0, %v1322
    %v1324 = vpop.f32.mrf.mxu0
    %1325 = vmatprep.mubr.bf16.mxu0 0
    %1326 = vmatmul.mubr.bf16.gmra.mxu0 %v1048
    %v1327 = vpop.f32.mrf.mxu0
    %v1328 = vadd.f32 0.0, %v1327
    %v1329 = vpop.f32.mrf.mxu0
    %v1330 = vpop.f32.mrf.mxu0
    %v1331 = vadd.f32 0.0, %v1330
    %v1332 = vpop.f32.mrf.mxu0
    %1333 = vmatprep.mubr.bf16.mxu0 0
    %1334 = vmatmul.mubr.bf16.gmra.mxu0 %v1049
    %v1335 = vpop.f32.mrf.mxu0
    %v1336 = vadd.f32 0.0, %v1335
    %v1337 = vpop.f32.mrf.mxu0
    %v1338 = vpop.f32.mrf.mxu0
    %v1339 = vadd.f32 0.0, %v1338
    %v1340 = vpop.f32.mrf.mxu0
    %1341 = vmatprep.mubr.bf16.mxu0 0
    %1342 = vmatmul.mubr.bf16.gmra.mxu0 %v1050
    %v1343 = vpop.f32.mrf.mxu0
    %v1344 = vadd.f32 0.0, %v1343
    %v1345 = vpop.f32.mrf.mxu0
    %v1346 = vpop.f32.mrf.mxu0
    %v1347 = vadd.f32 0.0, %v1346
    %v1348 = vpop.f32.mrf.mxu0
    %1349 = vdwg.mxu0
    %v1350 = vpack.c.bf16 %v1323, %v1320
    %v1351 = vpack.c.bf16 %v1331, %v1328
    %v1352 = vpack.c.bf16 %v1339, %v1336
    %v1353 = vpack.c.bf16 %v1347, %v1344
    %v1358 = vunpack.c.l.b16 %v1350
    %v1359 = vunpack.c.h.b16 %v1350
    %v1360 = vunpack.c.l.b16 %v1351
    %v1361 = vunpack.c.h.b16 %v1351
    %v1362 = vunpack.c.l.b16 %v1352
    %v1363 = vunpack.c.h.b16 %v1352
    %v1364 = vunpack.c.l.b16 %v1353
    %v1365 = vunpack.c.h.b16 %v1353
    %v1366 = vpack.c.b16 %v1358, %v1358
    %v1367 = vpack.c.b16 %v1359, %v1359
    %v1368 = vpack.c.b16 %v1360, %v1360
    %v1369 = vpack.c.b16 %v1361, %v1361
    %v1370 = vpack.c.b16 %v1362, %v1362
    %v1371 = vpack.c.b16 %v1363, %v1363
    %v1372 = vpack.c.b16 %v1364, %v1364
    %v1373 = vpack.c.b16 %v1365, %v1365
    %1382 = vst [vmem:[#allocation2 + $0x20] sm:$0xf] %v1366
    %1383 = vst [vmem:[#allocation2 + $0x24] sm:$0xf] %v1367
    %1384 = vst [vmem:[#allocation2 + $0x28] sm:$0xf] %v1368
    %1385 = vst [vmem:[#allocation2 + $0x2c] sm:$0xf] %v1369
    %1386 = vst [vmem:[#allocation2 + $0x30] sm:$0xf] %v1370
    %1387 = vst [vmem:[#allocation2 + $0x34] sm:$0xf] %v1371
    %1388 = vst [vmem:[#allocation2 + $0x38] sm:$0xf] %v1372
    %1389 = vst [vmem:[#allocation2 + $0x3c] sm:$0xf] %v1373
    %s1390 = scalar_lea.vmem [#allocation9], 128
    %v1391 = vld [vmem:[%s1390] sm:$0xf]
    %v1392 = vld [vmem:[%s1390 + $0x4] sm:$0xf]
    %v1393 = vld [vmem:[%s1390 + $0x8] sm:$0xf]
    %v1394 = vld [vmem:[%s1390 + $0xc] sm:$0xf]
    %v1395 = vld [vmem:[%s1390 + $0x10] sm:$0xf]
    %v1396 = vld [vmem:[%s1390 + $0x14] sm:$0xf]
    %v1397 = vld [vmem:[%s1390 + $0x18] sm:$0xf]
    %v1398 = vld [vmem:[%s1390 + $0x1c] sm:$0xf]
    %v1399 = vld [vmem:[%s1390 + $0x20] sm:$0xf]
    %v1400 = vld [vmem:[%s1390 + $0x24] sm:$0xf]
    %v1401 = vld [vmem:[%s1390 + $0x28] sm:$0xf]
    %v1402 = vld [vmem:[%s1390 + $0x2c] sm:$0xf]
    %v1403 = vld [vmem:[%s1390 + $0x30] sm:$0xf]
    %v1404 = vld [vmem:[%s1390 + $0x34] sm:$0xf]
    %v1405 = vld [vmem:[%s1390 + $0x38] sm:$0xf]
    %v1406 = vld [vmem:[%s1390 + $0x3c] sm:$0xf]
    %v1423 = vunpack.c.l.b16 %v1391
    %v1424 = vunpack.c.l.b16 %v1392
    %v1425 = vunpack.c.l.b16 %v1393
    %v1426 = vunpack.c.l.b16 %v1394
    %v1427 = vunpack.c.l.b16 %v1395
    %v1428 = vunpack.c.l.b16 %v1396
    %v1429 = vunpack.c.l.b16 %v1397
    %v1430 = vunpack.c.l.b16 %v1398
    %v1431 = vunpack.c.l.b16 %v1399
    %v1432 = vunpack.c.l.b16 %v1400
    %v1433 = vunpack.c.l.b16 %v1401
    %v1434 = vunpack.c.l.b16 %v1402
    %v1435 = vunpack.c.l.b16 %v1403
    %v1436 = vunpack.c.l.b16 %v1404
    %v1437 = vunpack.c.l.b16 %v1405
    %v1438 = vunpack.c.l.b16 %v1406
    %v1439 = vpack.c.b16 %v1424, %v1423
    %v1440 = vpack.c.b16 %v1426, %v1425
    %v1441 = vpack.c.b16 %v1428, %v1427
    %v1442 = vpack.c.b16 %v1430, %v1429
    %v1443 = vpack.c.b16 %v1432, %v1431
    %v1444 = vpack.c.b16 %v1434, %v1433
    %v1445 = vpack.c.b16 %v1436, %v1435
    %v1446 = vpack.c.b16 %v1438, %v1437
    %1455 = vmatprep.subr.bf16.mxu0 0
    %1456 = vmatpush1.bf16.msra.mxu0 %v1446
    %1457 = vmatprep.subr.bf16.mxu0 0
    %1458 = vmatpush1.bf16.msra.mxu0 %v1445
    %1459 = vmatprep.subr.bf16.mxu0 0
    %1460 = vmatpush1.bf16.msra.mxu0 %v1444
    %1461 = vmatprep.subr.bf16.mxu0 0
    %1462 = vmatpush1.bf16.msra.mxu0 %v1443
    %1463 = vmatprep.subr.bf16.mxu0 0
    %1464 = vmatpush1.bf16.msra.mxu0 %v1442
    %1465 = vmatprep.subr.bf16.mxu0 0
    %1466 = vmatpush1.bf16.msra.mxu0 %v1441
    %1467 = vmatprep.subr.bf16.mxu0 0
    %1468 = vmatpush1.bf16.msra.mxu0 %v1440
    %1469 = vmatprep.subr.bf16.mxu0 0
    %1470 = vmatpush1.bf16.msra.mxu0 %v1439
    %1471 = vmatprep.subr.bf16.mxu0 0
    %1472 = vmatpush2.bf16.msra.mxu0 0
    %1473 = vmatprep.subr.bf16.mxu0 0
    %1474 = vmatpush2.bf16.msra.mxu0 0
    %1475 = vmatprep.subr.bf16.mxu0 0
    %1476 = vmatpush2.bf16.msra.mxu0 0
    %1477 = vmatprep.subr.bf16.mxu0 0
    %1478 = vmatpush2.bf16.msra.mxu0 0
    %1479 = vmatprep.subr.bf16.mxu0 0
    %1480 = vmatpush2.bf16.msra.mxu0 0
    %1481 = vmatprep.subr.bf16.mxu0 0
    %1482 = vmatpush2.bf16.msra.mxu0 0
    %1483 = vmatprep.subr.bf16.mxu0 0
    %1484 = vmatpush2.bf16.msra.mxu0 0
    %1485 = vmatprep.subr.bf16.mxu0 0
    %1486 = vmatpush2.bf16.msra.mxu0 0
    %1487 = vmatprep.mubr.bf16.mxu0 0
    %1488 = vmatmul.mubr.bf16.gmra.mxu0 %v1047
    %v1489 = vpop.f32.mrf.mxu0
    %v1490 = vadd.f32 0.0, %v1489
    %v1491 = vpop.f32.mrf.mxu0
    %v1492 = vpop.f32.mrf.mxu0
    %v1493 = vadd.f32 0.0, %v1492
    %v1494 = vpop.f32.mrf.mxu0
    %1495 = vmatprep.mubr.bf16.mxu0 0
    %1496 = vmatmul.mubr.bf16.gmra.mxu0 %v1048
    %v1497 = vpop.f32.mrf.mxu0
    %v1498 = vadd.f32 0.0, %v1497
    %v1499 = vpop.f32.mrf.mxu0
    %v1500 = vpop.f32.mrf.mxu0
    %v1501 = vadd.f32 0.0, %v1500
    %v1502 = vpop.f32.mrf.mxu0
    %1503 = vmatprep.mubr.bf16.mxu0 0
    %1504 = vmatmul.mubr.bf16.gmra.mxu0 %v1049
    %v1505 = vpop.f32.mrf.mxu0
    %v1506 = vadd.f32 0.0, %v1505
    %v1507 = vpop.f32.mrf.mxu0
    %v1508 = vpop.f32.mrf.mxu0
    %v1509 = vadd.f32 0.0, %v1508
    %v1510 = vpop.f32.mrf.mxu0
    %1511 = vmatprep.mubr.bf16.mxu0 0
    %1512 = vmatmul.mubr.bf16.gmra.mxu0 %v1050
    %v1513 = vpop.f32.mrf.mxu0
    %v1514 = vadd.f32 0.0, %v1513
    %v1515 = vpop.f32.mrf.mxu0
    %v1516 = vpop.f32.mrf.mxu0
    %v1517 = vadd.f32 0.0, %v1516
    %v1518 = vpop.f32.mrf.mxu0
    %1519 = vdwg.mxu0
    %v1520 = vpack.c.bf16 %v1493, %v1490
    %v1521 = vpack.c.bf16 %v1501, %v1498
    %v1522 = vpack.c.bf16 %v1509, %v1506
    %v1523 = vpack.c.bf16 %v1517, %v1514
    %v1528 = vunpack.c.l.b16 %v1520
    %v1529 = vunpack.c.h.b16 %v1520
    %v1530 = vunpack.c.l.b16 %v1521
    %v1531 = vunpack.c.h.b16 %v1521
    %v1532 = vunpack.c.l.b16 %v1522
    %v1533 = vunpack.c.h.b16 %v1522
    %v1534 = vunpack.c.l.b16 %v1523
    %v1535 = vunpack.c.h.b16 %v1523
    %v1536 = vpack.c.b16 %v1528, %v1528
    %v1537 = vpack.c.b16 %v1529, %v1529
    %v1538 = vpack.c.b16 %v1530, %v1530
    %v1539 = vpack.c.b16 %v1531, %v1531
    %v1540 = vpack.c.b16 %v1532, %v1532
    %v1541 = vpack.c.b16 %v1533, %v1533
    %v1542 = vpack.c.b16 %v1534, %v1534
    %v1543 = vpack.c.b16 %v1535, %v1535
    %1552 = vst [vmem:[#allocation2 + $0x40] sm:$0xf] %v1536
    %1553 = vst [vmem:[#allocation2 + $0x44] sm:$0xf] %v1537
    %1554 = vst [vmem:[#allocation2 + $0x48] sm:$0xf] %v1538
    %1555 = vst [vmem:[#allocation2 + $0x4c] sm:$0xf] %v1539
    %1556 = vst [vmem:[#allocation2 + $0x50] sm:$0xf] %v1540
    %1557 = vst [vmem:[#allocation2 + $0x54] sm:$0xf] %v1541
    %1558 = vst [vmem:[#allocation2 + $0x58] sm:$0xf] %v1542
    %1559 = vst [vmem:[#allocation2 + $0x5c] sm:$0xf] %v1543
    %s1560 = scalar_lea.vmem [#allocation9], 192
    %v1561 = vld [vmem:[%s1560] sm:$0xf]
    %v1562 = vld [vmem:[%s1560 + $0x4] sm:$0xf]
    %v1563 = vld [vmem:[%s1560 + $0x8] sm:$0xf]
    %v1564 = vld [vmem:[%s1560 + $0xc] sm:$0xf]
    %v1565 = vld [vmem:[%s1560 + $0x10] sm:$0xf]
    %v1566 = vld [vmem:[%s1560 + $0x14] sm:$0xf]
    %v1567 = vld [vmem:[%s1560 + $0x18] sm:$0xf]
    %v1568 = vld [vmem:[%s1560 + $0x1c] sm:$0xf]
    %v1569 = vld [vmem:[%s1560 + $0x20] sm:$0xf]
    %v1570 = vld [vmem:[%s1560 + $0x24] sm:$0xf]
    %v1571 = vld [vmem:[%s1560 + $0x28] sm:$0xf]
    %v1572 = vld [vmem:[%s1560 + $0x2c] sm:$0xf]
    %v1573 = vld [vmem:[%s1560 + $0x30] sm:$0xf]
    %v1574 = vld [vmem:[%s1560 + $0x34] sm:$0xf]
    %v1575 = vld [vmem:[%s1560 + $0x38] sm:$0xf]
    %v1576 = vld [vmem:[%s1560 + $0x3c] sm:$0xf]
    %v1593 = vunpack.c.l.b16 %v1561
    %v1594 = vunpack.c.l.b16 %v1562
    %v1595 = vunpack.c.l.b16 %v1563
    %v1596 = vunpack.c.l.b16 %v1564
    %v1597 = vunpack.c.l.b16 %v1565
    %v1598 = vunpack.c.l.b16 %v1566
    %v1599 = vunpack.c.l.b16 %v1567
    %v1600 = vunpack.c.l.b16 %v1568
    %v1601 = vunpack.c.l.b16 %v1569
    %v1602 = vunpack.c.l.b16 %v1570
    %v1603 = vunpack.c.l.b16 %v1571
    %v1604 = vunpack.c.l.b16 %v1572
    %v1605 = vunpack.c.l.b16 %v1573
    %v1606 = vunpack.c.l.b16 %v1574
    %v1607 = vunpack.c.l.b16 %v1575
    %v1608 = vunpack.c.l.b16 %v1576
    %v1609 = vpack.c.b16 %v1594, %v1593
    %v1610 = vpack.c.b16 %v1596, %v1595
    %v1611 = vpack.c.b16 %v1598, %v1597
    %v1612 = vpack.c.b16 %v1600, %v1599
    %v1613 = vpack.c.b16 %v1602, %v1601
    %v1614 = vpack.c.b16 %v1604, %v1603
    %v1615 = vpack.c.b16 %v1606, %v1605
    %v1616 = vpack.c.b16 %v1608, %v1607
    %1625 = vmatprep.subr.bf16.mxu0 0
    %1626 = vmatpush1.bf16.msra.mxu0 %v1616
    %1627 = vmatprep.subr.bf16.mxu0 0
    %1628 = vmatpush1.bf16.msra.mxu0 %v1615
    %1629 = vmatprep.subr.bf16.mxu0 0
    %1630 = vmatpush1.bf16.msra.mxu0 %v1614
    %1631 = vmatprep.subr.bf16.mxu0 0
    %1632 = vmatpush1.bf16.msra.mxu0 %v1613
    %1633 = vmatprep.subr.bf16.mxu0 0
    %1634 = vmatpush1.bf16.msra.mxu0 %v1612
    %1635 = vmatprep.subr.bf16.mxu0 0
    %1636 = vmatpush1.bf16.msra.mxu0 %v1611
    %1637 = vmatprep.subr.bf16.mxu0 0
    %1638 = vmatpush1.bf16.msra.mxu0 %v1610
    %1639 = vmatprep.subr.bf16.mxu0 0
    %1640 = vmatpush1.bf16.msra.mxu0 %v1609
    %1641 = vmatprep.subr.bf16.mxu0 0
    %1642 = vmatpush2.bf16.msra.mxu0 0
    %1643 = vmatprep.subr.bf16.mxu0 0
    %1644 = vmatpush2.bf16.msra.mxu0 0
    %1645 = vmatprep.subr.bf16.mxu0 0
    %1646 = vmatpush2.bf16.msra.mxu0 0
    %1647 = vmatprep.subr.bf16.mxu0 0
    %1648 = vmatpush2.bf16.msra.mxu0 0
    %1649 = vmatprep.subr.bf16.mxu0 0
    %1650 = vmatpush2.bf16.msra.mxu0 0
    %1651 = vmatprep.subr.bf16.mxu0 0
    %1652 = vmatpush2.bf16.msra.mxu0 0
    %1653 = vmatprep.subr.bf16.mxu0 0
    %1654 = vmatpush2.bf16.msra.mxu0 0
    %1655 = vmatprep.subr.bf16.mxu0 0
    %1656 = vmatpush2.bf16.msra.mxu0 0
    %1657 = vmatprep.mubr.bf16.mxu0 0
    %1658 = vmatmul.mubr.bf16.gmra.mxu0 %v1047
    %v1659 = vpop.f32.mrf.mxu0
    %v1660 = vadd.f32 0.0, %v1659
    %v1661 = vpop.f32.mrf.mxu0
    %v1662 = vpop.f32.mrf.mxu0
    %v1663 = vadd.f32 0.0, %v1662
    %v1664 = vpop.f32.mrf.mxu0
    %1665 = vmatprep.mubr.bf16.mxu0 0
    %1666 = vmatmul.mubr.bf16.gmra.mxu0 %v1048
    %v1667 = vpop.f32.mrf.mxu0
    %v1668 = vadd.f32 0.0, %v1667
    %v1669 = vpop.f32.mrf.mxu0
    %v1670 = vpop.f32.mrf.mxu0
    %v1671 = vadd.f32 0.0, %v1670
    %v1672 = vpop.f32.mrf.mxu0
    %1673 = vmatprep.mubr.bf16.mxu0 0
    %1674 = vmatmul.mubr.bf16.gmra.mxu0 %v1049
    %v1675 = vpop.f32.mrf.mxu0
    %v1676 = vadd.f32 0.0, %v1675
    %v1677 = vpop.f32.mrf.mxu0
    %v1678 = vpop.f32.mrf.mxu0
    %v1679 = vadd.f32 0.0, %v1678
    %v1680 = vpop.f32.mrf.mxu0
    %1681 = vmatprep.mubr.bf16.mxu0 0
    %1682 = vmatmul.mubr.bf16.gmra.mxu0 %v1050
    %v1683 = vpop.f32.mrf.mxu0
    %v1684 = vadd.f32 0.0, %v1683
    %v1685 = vpop.f32.mrf.mxu0
    %v1686 = vpop.f32.mrf.mxu0
    %v1687 = vadd.f32 0.0, %v1686
    %v1688 = vpop.f32.mrf.mxu0
    %1689 = vdwg.mxu0
    %v1690 = vpack.c.bf16 %v1663, %v1660
    %v1691 = vpack.c.bf16 %v1671, %v1668
    %v1692 = vpack.c.bf16 %v1679, %v1676
    %v1693 = vpack.c.bf16 %v1687, %v1684
    %v1698 = vunpack.c.l.b16 %v1690
    %v1699 = vunpack.c.h.b16 %v1690
    %v1700 = vunpack.c.l.b16 %v1691
    %v1701 = vunpack.c.h.b16 %v1691
    %v1702 = vunpack.c.l.b16 %v1692
    %v1703 = vunpack.c.h.b16 %v1692
    %v1704 = vunpack.c.l.b16 %v1693
    %v1705 = vunpack.c.h.b16 %v1693
    %v1706 = vpack.c.b16 %v1698, %v1698
    %v1707 = vpack.c.b16 %v1699, %v1699
    %v1708 = vpack.c.b16 %v1700, %v1700
    %v1709 = vpack.c.b16 %v1701, %v1701
    %v1710 = vpack.c.b16 %v1702, %v1702
    %v1711 = vpack.c.b16 %v1703, %v1703
    %v1712 = vpack.c.b16 %v1704, %v1704
    %v1713 = vpack.c.b16 %v1705, %v1705
    %1722 = vst [vmem:[#allocation2 + $0x60] sm:$0xf] %v1706
    %1723 = vst [vmem:[#allocation2 + $0x64] sm:$0xf] %v1707
    %1724 = vst [vmem:[#allocation2 + $0x68] sm:$0xf] %v1708
    %1725 = vst [vmem:[#allocation2 + $0x6c] sm:$0xf] %v1709
    %1726 = vst [vmem:[#allocation2 + $0x70] sm:$0xf] %v1710
    %1727 = vst [vmem:[#allocation2 + $0x74] sm:$0xf] %v1711
    %1728 = vst [vmem:[#allocation2 + $0x78] sm:$0xf] %v1712
    %1729 = vst [vmem:[#allocation2 + $0x7c] sm:$0xf] %v1713
    %v1730 = vld [vmem:[#allocation2] sm:$0xf]
    %v1731 = vld [vmem:[#allocation2 + $0x4] sm:$0xf]
    %v1732 = vld [vmem:[#allocation2 + $0x8] sm:$0xf]
    %v1733 = vld [vmem:[#allocation2 + $0xc] sm:$0xf]
    %v1734 = vld [vmem:[#allocation2 + $0x10] sm:$0xf]
    %v1735 = vld [vmem:[#allocation2 + $0x14] sm:$0xf]
    %v1736 = vld [vmem:[#allocation2 + $0x18] sm:$0xf]
    %v1737 = vld [vmem:[#allocation2 + $0x1c] sm:$0xf]
    %v1738 = vld [vmem:[#allocation2 + $0x20] sm:$0xf]
    %v1739 = vld [vmem:[#allocation2 + $0x24] sm:$0xf]
    %v1740 = vld [vmem:[#allocation2 + $0x28] sm:$0xf]
    %v1741 = vld [vmem:[#allocation2 + $0x2c] sm:$0xf]
    %v1742 = vld [vmem:[#allocation2 + $0x30] sm:$0xf]
    %v1743 = vld [vmem:[#allocation2 + $0x34] sm:$0xf]
    %v1744 = vld [vmem:[#allocation2 + $0x38] sm:$0xf]
    %v1745 = vld [vmem:[#allocation2 + $0x3c] sm:$0xf]
    %v1746 = vld [vmem:[#allocation2 + $0x40] sm:$0xf]
    %v1747 = vld [vmem:[#allocation2 + $0x44] sm:$0xf]
    %v1748 = vld [vmem:[#allocation2 + $0x48] sm:$0xf]
    %v1749 = vld [vmem:[#allocation2 + $0x4c] sm:$0xf]
    %v1750 = vld [vmem:[#allocation2 + $0x50] sm:$0xf]
    %v1751 = vld [vmem:[#allocation2 + $0x54] sm:$0xf]
    %v1752 = vld [vmem:[#allocation2 + $0x58] sm:$0xf]
    %v1753 = vld [vmem:[#allocation2 + $0x5c] sm:$0xf]
    %v1754 = vld [vmem:[#allocation2 + $0x60] sm:$0xf]
    %v1755 = vld [vmem:[#allocation2 + $0x64] sm:$0xf]
    %v1756 = vld [vmem:[#allocation2 + $0x68] sm:$0xf]
    %v1757 = vld [vmem:[#allocation2 + $0x6c] sm:$0xf]
    %v1758 = vld [vmem:[#allocation2 + $0x70] sm:$0xf]
    %v1759 = vld [vmem:[#allocation2 + $0x74] sm:$0xf]
    %v1760 = vld [vmem:[#allocation2 + $0x78] sm:$0xf]
    %v1761 = vld [vmem:[#allocation2 + $0x7c] sm:$0xf]
    %v1762 = vld [vmem:[%s5] sm:$0x1]
    %v1764 = vlaneseq
    %v1765 = vshrl.u32 %v1764, 7
    %v1766 = vsub.s32 0, %v1765
    %v1767 = vrot.slane %v1762, %v1766
    %v1801 = vunpack.c.l.b16 %v1730
    %v1802 = vunpack.c.l.b16 %v1731
    %v1803 = vunpack.c.l.b16 %v1732
    %v1804 = vunpack.c.l.b16 %v1733
    %v1805 = vunpack.c.l.b16 %v1734
    %v1806 = vunpack.c.l.b16 %v1735
    %v1807 = vunpack.c.l.b16 %v1736
    %v1808 = vunpack.c.l.b16 %v1737
    %v1809 = vunpack.c.l.b16 %v1738
    %v1810 = vunpack.c.l.b16 %v1739
    %v1811 = vunpack.c.l.b16 %v1740
    %v1812 = vunpack.c.l.b16 %v1741
    %v1813 = vunpack.c.l.b16 %v1742
    %v1814 = vunpack.c.l.b16 %v1743
    %v1815 = vunpack.c.l.b16 %v1744
    %v1816 = vunpack.c.l.b16 %v1745
    %v1817 = vunpack.c.l.b16 %v1746
    %v1818 = vunpack.c.l.b16 %v1747
    %v1819 = vunpack.c.l.b16 %v1748
    %v1820 = vunpack.c.l.b16 %v1749
    %v1821 = vunpack.c.l.b16 %v1750
    %v1822 = vunpack.c.l.b16 %v1751
    %v1823 = vunpack.c.l.b16 %v1752
    %v1824 = vunpack.c.l.b16 %v1753
    %v1825 = vunpack.c.l.b16 %v1754
    %v1826 = vunpack.c.l.b16 %v1755
    %v1827 = vunpack.c.l.b16 %v1756
    %v1828 = vunpack.c.l.b16 %v1757
    %v1829 = vunpack.c.l.b16 %v1758
    %v1830 = vunpack.c.l.b16 %v1759
    %v1831 = vunpack.c.l.b16 %v1760
    %v1832 = vunpack.c.l.b16 %v1761
    %v1833 = vpack.c.b16 %v1802, %v1801
    %v1834 = vpack.c.b16 %v1804, %v1803
    %v1835 = vpack.c.b16 %v1806, %v1805
    %v1836 = vpack.c.b16 %v1808, %v1807
    %v1837 = vpack.c.b16 %v1810, %v1809
    %v1838 = vpack.c.b16 %v1812, %v1811
    %v1839 = vpack.c.b16 %v1814, %v1813
    %v1840 = vpack.c.b16 %v1816, %v1815
    %v1841 = vpack.c.b16 %v1818, %v1817
    %v1842 = vpack.c.b16 %v1820, %v1819
    %v1843 = vpack.c.b16 %v1822, %v1821
    %v1844 = vpack.c.b16 %v1824, %v1823
    %v1845 = vpack.c.b16 %v1826, %v1825
    %v1846 = vpack.c.b16 %v1828, %v1827
    %v1847 = vpack.c.b16 %v1830, %v1829
    %v1848 = vpack.c.b16 %v1832, %v1831
    %1865 = vmatprep.subr.bf16.mxu0 0
    %1866 = vmatpush1.bf16.msra.mxu0 %v1840
    %1867 = vmatprep.subr.bf16.mxu0 0
    %1868 = vmatpush1.bf16.msra.mxu0 %v1839
    %1869 = vmatprep.subr.bf16.mxu0 0
    %1870 = vmatpush1.bf16.msra.mxu0 %v1838
    %1871 = vmatprep.subr.bf16.mxu0 0
    %1872 = vmatpush1.bf16.msra.mxu0 %v1837
    %1873 = vmatprep.subr.bf16.mxu0 0
    %1874 = vmatpush1.bf16.msra.mxu0 %v1836
    %1875 = vmatprep.subr.bf16.mxu0 0
    %1876 = vmatpush1.bf16.msra.mxu0 %v1835
    %1877 = vmatprep.subr.bf16.mxu0 0
    %1878 = vmatpush1.bf16.msra.mxu0 %v1834
    %1879 = vmatprep.subr.bf16.mxu0 0
    %1880 = vmatpush1.bf16.msra.mxu0 %v1833
    %1881 = vmatprep.subr.bf16.mxu0 0
    %1882 = vmatpush2.bf16.msra.mxu0 %v1848
    %1883 = vmatprep.subr.bf16.mxu0 0
    %1884 = vmatpush2.bf16.msra.mxu0 %v1847
    %1885 = vmatprep.subr.bf16.mxu0 0
    %1886 = vmatpush2.bf16.msra.mxu0 %v1846
    %1887 = vmatprep.subr.bf16.mxu0 0
    %1888 = vmatpush2.bf16.msra.mxu0 %v1845
    %1889 = vmatprep.subr.bf16.mxu0 0
    %1890 = vmatpush2.bf16.msra.mxu0 %v1844
    %1891 = vmatprep.subr.bf16.mxu0 0
    %1892 = vmatpush2.bf16.msra.mxu0 %v1843
    %1893 = vmatprep.subr.bf16.mxu0 0
    %1894 = vmatpush2.bf16.msra.mxu0 %v1842
    %1895 = vmatprep.subr.bf16.mxu0 0
    %1896 = vmatpush2.bf16.msra.mxu0 %v1841
    %1897 = vmatprep.mubr.bf16.mxu0 %v863
    %1898 = vmatmul.mubr.bf16.gmra.mxu0 %v862
    %v1899 = vpop.f32.mrf.mxu0
    %v1900 = vadd.f32 %v1767, %v1899
    %v1901 = vpop.f32.mrf.mxu0
    %v1902 = vpop.f32.mrf.mxu0
    %v1903 = vadd.f32 %v1767, %v1902
    %v1904 = vpop.f32.mrf.mxu0
    %1905 = vmatprep.mubr.bf16.mxu0 %v865
    %1906 = vmatmul.mubr.bf16.gmra.mxu0 %v864
    %v1907 = vpop.f32.mrf.mxu0
    %v1908 = vadd.f32 %v1767, %v1907
    %v1909 = vpop.f32.mrf.mxu0
    %v1910 = vpop.f32.mrf.mxu0
    %v1911 = vadd.f32 %v1767, %v1910
    %v1912 = vpop.f32.mrf.mxu0
    %1913 = vmatprep.mubr.bf16.mxu0 %v867
    %1914 = vmatmul.mubr.bf16.gmra.mxu0 %v866
    %v1915 = vpop.f32.mrf.mxu0
    %v1916 = vadd.f32 %v1767, %v1915
    %v1917 = vpop.f32.mrf.mxu0
    %v1918 = vpop.f32.mrf.mxu0
    %v1919 = vadd.f32 %v1767, %v1918
    %v1920 = vpop.f32.mrf.mxu0
    %1921 = vmatprep.mubr.bf16.mxu0 %v869
    %1922 = vmatmul.mubr.bf16.gmra.mxu0 %v868
    %v1923 = vpop.f32.mrf.mxu0
    %v1924 = vadd.f32 %v1767, %v1923
    %v1925 = vpop.f32.mrf.mxu0
    %v1926 = vpop.f32.mrf.mxu0
    %v1927 = vadd.f32 %v1767, %v1926
    %v1928 = vpop.f32.mrf.mxu0
    %1929 = vdwg.mxu0
    %1930 = vst [vmem:[#allocation11] sm:$0xff] %v1900
    %1931 = vst [vmem:[#allocation11 + $0x8] sm:$0xff] %v1903
    %1932 = vst [vmem:[#allocation11 + $0x10] sm:$0xff] %v1908
    %1933 = vst [vmem:[#allocation11 + $0x18] sm:$0xff] %v1911
    %1934 = vst [vmem:[#allocation11 + $0x20] sm:$0xff] %v1916
    %1935 = vst [vmem:[#allocation11 + $0x28] sm:$0xff] %v1919
    %1936 = vst [vmem:[#allocation11 + $0x30] sm:$0xff] %v1924
    %1937 = vst [vmem:[#allocation11 + $0x38] sm:$0xff] %v1927
    // Predicated region
    $region42: #{tpu_custom_call.1} parent=1 // pred_check
      _
    $region43: #{tpu_custom_call.1} parent=1 // pred_check_branch
      %1939 = sbr.rel (0) target = $region45
    $region44: #{tpu_custom_call.1} parent=1 // pred_region
      %s1941 = ssub.s32 1024, 1024
      %1942 = vsyncadd [#allocation5], %s1941
      %s1943 = sshll.u32 [#allocation11], 4
      %s1944 = int_to_ptr.vmem [resolvable:$true] %s1943
      %1949 = dma.vmem_to_hbm [thread:$0]  %s1944, 1024, %s6, [#allocation5], 128, 128, 8
    $region45: #{tpu_custom_call.1} parent=1 // pred_fallthru
      _
    // Predicated region
    $region46: #{tpu_custom_call.1} parent=1 // pred_check
      _
    $region47: #{tpu_custom_call.1} parent=1 // pred_check_branch
      %1951 = sbr.rel (0) target = $region49
    $region48: #{tpu_custom_call.1} parent=1 // pred_region
      %1952 = dma.done [#allocation5], 1024
    $region49: #{tpu_custom_call.1} parent=1 // pred_fallthru
      _
    %1953 = vsyncpa [#allocation4], 1
    %1954 = vsyncpa [#allocation7], 1
    %1955 = vsyncpa [#allocation10], 1
    %1956 = vsyncpa [#allocation5], 1

</llo_original>
